<compile_context>
chip_gen: v7x
topology: tpu7x:2x2x1
jax: 0.10.0
libtpu: 0.0.40
codegen_flags: <defaults>
</compile_context>

<pallas_src>
import functools
import math

import jax
import jax.numpy as jnp
from jax.experimental import pallas as pl
from jax.experimental.pallas import tpu as pltpu

BN_EPS = 0.001
LANE = 128


def _round_up(x, m):
    return (x + m - 1) // m * m


# --------- Pass 1: conv tile matmul (MXU, bf16 x bf16 -> f32) + per-tile channel stats ---------
def _conv_stats_kernel(p_ref, w_ref, y_ref, stat_ref):
    # p: [1, ts, K] bf16, w: [K, C] bf16 -> acc [ts, C] f32 (f32 accumulate on the MXU).
    acc = jnp.dot(p_ref[0], w_ref[...], preferred_element_type=jnp.float32)
    # bf16 intermediate: written once / read once, dominates HBM traffic of both passes.
    y_ref[0] = acc.astype(y_ref.dtype)
    # Per-tile channel partials in f32 (the global reduction finishes outside the grid,
    # so the grid stays fully "parallel").  Zero-padded channels contribute exact zeros.
    # TODO(synk): single-pass E[x^2]-mean^2 can cancel catastrophically for strongly
    # non-zero-mean activations; use centered/Welford partials if fed post-ReLU maps.
    stat_ref[0, 0:1, :] = jnp.sum(acc, axis=0, keepdims=True)
    stat_ref[0, 1:2, :] = jnp.sum(acc * acc, axis=0, keepdims=True)


# --------- Pass 2: y*scale + shift, ReLU, in-kernel transpose -> channel-major output ---------
def _bn_relu_nchw_kernel(y_ref, scale_ref, shift_ref, o_ref, *, cout):
    y = y_ref[0].astype(jnp.float32)                              # [ts, C] (upcast, VPU)
    z = jnp.maximum(y * scale_ref[...] + shift_ref[...], 0.0)     # FMA + ReLU (VPU)
    zt = z.T                                                      # [C, ts]  (XLU, free slot)
    o_ref[0] = zt[:cout, :]                                       # drop padded channels


def _im2col_nhwc(x_nhwc, kh, kw, pad):
    """[N,H,W,C] -> [N, Hout*Wout, kh*kw*C] (stride 1)."""
    x_p = jnp.pad(x_nhwc, ((0, 0), (pad, pad), (pad, pad), (0, 0)))
    n, hp, wp, c = x_p.shape
    hout, wout = hp - kh + 1, wp - kw + 1
    cols = [x_p[:, i:i + hout, j:j + wout, :] for i in range(kh) for j in range(kw)]
    patches = jnp.stack(cols, axis=3)                       # [N, Hout, Wout, kh*kw, C]
    return patches.reshape(n, hout * wout, kh * kw * c), (n, hout, wout)


@functools.partial(jax.jit, static_argnames=("kernel_size", "padding", "block_m"))
def basic_conv2d(x_nchw, conv_w, conv_b, bn_gamma, bn_beta, *,
                 kernel_size=3, padding=1, block_m=1024):
    """Forward of BasicConv2d. x_nchw: [N, Cin, H, W] f32 -> [N, Cout, Hout, Wout] f32."""
    kh = kw = kernel_size
    cout = conv_w.shape[0]

    # Conditional lane padding: pad Cout to 128 only when that at most doubles the
    # channel count; otherwise the extra HBM bytes cost far more than masked stores.
    cpad = _round_up(cout, LANE)
    if cpad > 2 * cout:
        cpad = cout

    # --- glue: layout + im2col (bf16 operands: MXU-native, half the HBM bytes) ---
    x_nhwc = jnp.transpose(x_nchw, (0, 2, 3, 1))
    patches, (n, hout, wout) = _im2col_nhwc(x_nhwc, kh, kw, padding)
    patches = patches.astype(jnp.bfloat16)
    _, s, k = patches.shape                               # s = Hout*Wout, k = kh*kw*Cin

    # torch weight [Cout, Cin, KH, KW] -> [K, Cpad] (column order matches patches), bf16.
    w_mat = jnp.transpose(conv_w, (2, 3, 1, 0)).reshape(k, cout)
    w_mat = jnp.pad(w_mat, ((0, 0), (0, cpad - cout))).astype(jnp.bfloat16)

    # Conv bias is exactly cancelled by training-mode BN mean subtraction; skip it
    # (conv_b is accepted only for interface parity with the PyTorch module).
    del conv_b

    # --- spatial tiling: the tile divides Hout*Wout exactly (no output padding or
    #     trailing slice pass) and is a multiple of 128 for lane-dense output stores.
    block_m = _round_up(block_m, LANE)
    ts = math.gcd(s, block_m) if s % LANE == 0 else s

    def step_bytes(t):  # double-buffered per-step VMEM footprint (both passes)
        p1 = 2 * (t * k * 2 + t * cpad * 2 + 2 * cpad * 4) + 2 * k * cpad * 2
        p2 = 2 * (t * cpad * 2 + cout * t * 4) + 2 * (2 * cpad * 4)
        return max(p1, p2)

    while (s % LANE == 0 and ts > LANE and ts % 256 == 0
           and step_bytes(ts) > 12 * 1024 * 1024):
        ts //= 2
    n_s = s // ts
    grid = (n, n_s)   # N >= 2 in practice -> >= 2 parallel grid points for v7x's 2 TCs

    vmem_limit = int(min(48 * 1024 * 1024,
                         max(16 * 1024 * 1024, 4 * step_bytes(ts))))
    cparams = pltpu.CompilerParams(
        dimension_semantics=("parallel", "parallel"),
        vmem_limit_bytes=vmem_limit,
    )

    # ---------------- Pass 1: conv + per-tile channel partial stats ----------------
    conv_bf16, partials = pl.pallas_call(
        _conv_stats_kernel,
        grid=grid,
        in_specs=[
            pl.BlockSpec((1, ts, k), lambda ni, si: (ni, si, 0)),
            pl.BlockSpec((k, cpad), lambda ni, si: (0, 0)),
        ],
        out_specs=[
            pl.BlockSpec((1, ts, cpad), lambda ni, si: (ni, si, 0)),
            pl.BlockSpec((1, 2, cpad), lambda ni, si: (ni * n_s + si, 0, 0)),
        ],
        out_shape=[
            jax.ShapeDtypeStruct((n, s, cpad), jnp.bfloat16),
            jax.ShapeDtypeStruct((n * n_s, 2, cpad), jnp.float32),
        ],
        compiler_params=cparams,
        cost_estimate=pl.CostEstimate(
            flops=2 * n * s * k * cpad,
            transcendentals=0,
            bytes_accessed=(n * s * k * 2 + k * cpad * 2
                            + n * s * cpad * 2 + n * n_s * 2 * cpad * 4),
        ),
    )(patches, w_mat)

    # --- glue: tiny O(Cout) finalize: mean/var -> per-channel scale, shift ---
    m_total = n * s
    sums = jnp.sum(partials[:, 0, :], axis=0)
    sumsq = jnp.sum(partials[:, 1, :], axis=0)
    mean = sums / m_total
    var = jnp.maximum(sumsq / m_total - mean * mean, 0.0)          # biased variance
    inv_std = jax.lax.rsqrt(var + BN_EPS)
    gamma_pad = jnp.pad(bn_gamma.astype(jnp.float32), (0, cpad - cout))
    beta_pad = jnp.pad(bn_beta.astype(jnp.float32), (0, cpad - cout))
    scale = (gamma_pad * inv_std).reshape(1, cpad)
    shift = (beta_pad - mean * gamma_pad * inv_std).reshape(1, cpad)

    # -------- Pass 2: normalize + ReLU + channel-major layout (no trailing XLA pass) --------
    out3d = pl.pallas_call(
        functools.partial(_bn_relu_nchw_kernel, cout=cout),
        grid=grid,
        in_specs=[
            pl.BlockSpec((1, ts, cpad), lambda ni, si: (ni, si, 0)),
            pl.BlockSpec((1, cpad), lambda ni, si: (0, 0)),
            pl.BlockSpec((1, cpad), lambda ni, si: (0, 0)),
        ],
        out_specs=pl.BlockSpec((1, cout, ts), lambda ni, si: (ni, 0, si)),
        out_shape=jax.ShapeDtypeStruct((n, cout, s), jnp.float32),
        compiler_params=cparams,
        cost_estimate=pl.CostEstimate(
            flops=3 * n * s * cpad,
            transcendentals=0,
            bytes_accessed=n * s * cpad * 2 + n * cout * s * 4 + 2 * cpad * 4,
        ),
    )(conv_bf16, scale, shift)

    # Metadata-only reshape (splits the trailing contiguous dim); no extra HBM pass.
    return out3d.reshape(n, cout, hout, wout)


def _reference(x_nchw, conv_w, conv_b, bn_gamma, bn_beta, padding=1,
               matmul_dtype=jnp.float32):
    """Pure-JAX reference with the PyTorch module's semantics."""
    y = jax.lax.conv_general_dilated(
        x_nchw.astype(matmul_dtype), conv_w.astype(matmul_dtype),
        window_strides=(1, 1),
        padding=[(padding, padding), (padding, padding)],
        dimension_numbers=("NCHW", "OIHW", "NCHW"),
        preferred_element_type=jnp.float32,
    ) + conv_b[None, :, None, None]
    mean = jnp.mean(y, axis=(0, 2, 3), keepdims=True)
    var = jnp.mean((y - mean) ** 2, axis=(0, 2, 3), keepdims=True)   # biased
    y = (y - mean) * jax.lax.rsqrt(var + BN_EPS)
    y = y * bn_gamma[None, :, None, None] + bn_beta[None, :, None, None]
    return jnp.maximum(y, 0.0)


if __name__ == "__main__":
    in_channel, out_channel = 4, 8
    n, h, w = 2, 16, 16
    ksize, pad = 3, 1

    key = jax.random.PRNGKey(0)
    kx, kw_, kb = jax.random.split(key, 3)

    x = jax.random.normal(kx, (n, in_channel, h, w), dtype=jnp.float32)
    fan_in = in_channel * ksize * ksize
    bound = 1.0 / (fan_in ** 0.5)
    conv_w = jax.random.uniform(kw_, (out_channel, in_channel, ksize, ksize),
                                minval=-bound, maxval=bound, dtype=jnp.float32)
    conv_b = jax.random.uniform(kb, (out_channel,), minval=-bound, maxval=bound,
                                dtype=jnp.float32)
    bn_gamma = jnp.ones((out_channel,), jnp.float32)   # BatchNorm2d default init
    bn_beta = jnp.zeros((out_channel,), jnp.float32)

    out = basic_conv2d(x, conv_w, conv_b, bn_gamma, bn_beta,
                       kernel_size=ksize, padding=pad)
    out = jax.block_until_ready(out)
    assert out.shape == (n, out_channel, h, w), out.shape

    # Check vs a reference with the same bf16 MXU-operand precision (kernel additionally
    # stores the conv intermediate in bf16, ~2e-3 extra rounding after normalization).
    ref_bf16 = _reference(x, conv_w, conv_b, bn_gamma, bn_beta, padding=pad,
                          matmul_dtype=jnp.bfloat16)
    assert jnp.allclose(out, ref_bf16, atol=1e-2, rtol=1e-2), \
        float(jnp.max(jnp.abs(out - ref_bf16)))

    # Looser check vs full-f32 module semantics.
    ref_f32 = _reference(x, conv_w, conv_b, bn_gamma, bn_beta, padding=pad)
    assert jnp.allclose(out, ref_f32, atol=5e-2, rtol=5e-2), \
        float(jnp.max(jnp.abs(out - ref_f32)))

    print("KERNEL_OK")
</pallas_src>

<mosaic_0001>
module attributes {stable_mosaic.version = 11 : i64} {
  func.func @_conv_stats_kernel(%arg0: i32, %arg1: i32, %arg2: memref<1x256x36xbf16, #tpu.memory_space<vmem>>, %arg3: memref<36x8xbf16, #tpu.memory_space<vmem>>, %arg4: memref<1x256x8xbf16, #tpu.memory_space<vmem>>, %arg5: memref<1x2x8xf32, #tpu.memory_space<vmem>>) attributes {dimension_semantics = [#tpu.dimension_semantics<parallel>, #tpu.dimension_semantics<parallel>], iteration_bounds = array<i64: 2, 1>, scalar_prefetch = 0 : i64, scratch_operands = 0 : i64, tpu.core_type = #tpu.core_type<tc>, window_params = [{transform_indices = @transform_0, window_bounds = array<i64: 1, 256, 36>}, {pipeline_mode = #tpu.pipeline_mode<synchronous>, transform_indices = @transform_1, window_bounds = array<i64: 36, 8>}, {transform_indices = @transform_2, window_bounds = array<i64: 1, 256, 8>}, {transform_indices = @transform_3, window_bounds = array<i64: 1, 2, 8>}]} {
    %c0 = arith.constant 0 : index
    %c0_0 = arith.constant 0 : index
    %c0_1 = arith.constant 0 : index
    %0 = vector.load %arg2[%c0, %c0_0, %c0_1] : memref<1x256x36xbf16, #tpu.memory_space<vmem>>, vector<1x256x36xbf16>
    %1 = vector.shape_cast %0 : vector<1x256x36xbf16> to vector<256x36xbf16>
    %c0_2 = arith.constant 0 : index
    %c0_3 = arith.constant 0 : index
    %2 = vector.load %arg3[%c0_2, %c0_3] : memref<36x8xbf16, #tpu.memory_space<vmem>>, vector<36x8xbf16>
    %cst = arith.constant dense<0.000000e+00> : vector<256x8xf32>
    %3 = tpu.matmul %1, %2, %cst {dimension_numbers = #tpu.dot_dimension_numbers<[1], [0], [0], [1], [0, 0, 1, 1], [], []>} : vector<256x36xbf16>, vector<36x8xbf16>, vector<256x8xf32> -> vector<256x8xf32>
    %4 = arith.truncf %3 : vector<256x8xf32> to vector<256x8xbf16>
    %c0_4 = arith.constant 0 : index
    %c0_5 = arith.constant 0 : index
    %c0_6 = arith.constant 0 : index
    %5 = vector.load %arg4[%c0_4, %c0_5, %c0_6] : memref<1x256x8xbf16, #tpu.memory_space<vmem>>, vector<1x256x8xbf16>
    %6 = vector.shape_cast %5 : vector<1x256x8xbf16> to vector<256x8xbf16>
    %7 = vector.shape_cast %4 : vector<256x8xbf16> to vector<1x256x8xbf16>
    tpu.vector_store %arg4[%c0_4, %c0_5, %c0_6], %7 {strides = array<i32>} : memref<1x256x8xbf16, #tpu.memory_space<vmem>>, vector<1x256x8xbf16>,
    %cst_7 = arith.constant dense<0.000000e+00> : vector<8xf32>
    %8 = vector.multi_reduction <add>, %3, %cst_7 [0] : vector<256x8xf32> to vector<8xf32>
    %9 = vector.shape_cast %8 : vector<8xf32> to vector<1x8xf32>
    %c0_8 = arith.constant 0 : index
    %c0_9 = arith.constant 0 : index
    %c0_10 = arith.constant 0 : index
    %10 = vector.load %arg5[%c0_8, %c0_9, %c0_10] : memref<1x2x8xf32, #tpu.memory_space<vmem>>, vector<1x1x8xf32>
    %11 = vector.shape_cast %10 : vector<1x1x8xf32> to vector<1x8xf32>
    %12 = vector.shape_cast %9 : vector<1x8xf32> to vector<1x1x8xf32>
    tpu.vector_store %arg5[%c0_8, %c0_9, %c0_10], %12 {strides = array<i32>} : memref<1x2x8xf32, #tpu.memory_space<vmem>>, vector<1x1x8xf32>,
    %13 = arith.mulf %3, %3 : vector<256x8xf32>
    %cst_11 = arith.constant dense<0.000000e+00> : vector<8xf32>
    %14 = vector.multi_reduction <add>, %13, %cst_11 [0] : vector<256x8xf32> to vector<8xf32>
    %15 = vector.shape_cast %14 : vector<8xf32> to vector<1x8xf32>
    %c0_12 = arith.constant 0 : index
    %c1 = arith.constant 1 : index
    %c0_13 = arith.constant 0 : index
    %16 = vector.load %arg5[%c0_12, %c1, %c0_13] : memref<1x2x8xf32, #tpu.memory_space<vmem>>, vector<1x1x8xf32>
    %17 = vector.shape_cast %16 : vector<1x1x8xf32> to vector<1x8xf32>
    %18 = vector.shape_cast %15 : vector<1x8xf32> to vector<1x1x8xf32>
    tpu.vector_store %arg5[%c0_12, %c1, %c0_13], %18 {strides = array<i32>} : memref<1x2x8xf32, #tpu.memory_space<vmem>>, vector<1x1x8xf32>,
    return
  }
  func.func @transform_0(%arg0: i32, %arg1: i32) -> (i32, i32, i32) {
    %c0_i32 = arith.constant 0 : i32
    %c0_i32_0 = arith.constant 0 : i32
    return %arg0, %arg1, %c0_i32 : i32, i32, i32
  }
  func.func @transform_1(%arg0: i32, %arg1: i32) -> (i32, i32) {
    %c0_i32 = arith.constant 0 : i32
    %c0_i32_0 = arith.constant 0 : i32
    %c0_i32_1 = arith.constant 0 : i32
    return %c0_i32, %c0_i32_0 : i32, i32
  }
  func.func @transform_2(%arg0: i32, %arg1: i32) -> (i32, i32, i32) {
    %c0_i32 = arith.constant 0 : i32
    %c0_i32_0 = arith.constant 0 : i32
    return %arg0, %arg1, %c0_i32 : i32, i32, i32
  }
  func.func @transform_3(%arg0: i32, %arg1: i32) -> (i32, i32, i32) {
    %c1_i32 = arith.constant 1 : i32
    %0 = arith.muli %arg0, %c1_i32 : i32
    %1 = arith.addi %0, %arg1 : i32
    %c0_i32 = arith.constant 0 : i32
    %c0_i32_0 = arith.constant 0 : i32
    %c0_i32_1 = arith.constant 0 : i32
    return %1, %c0_i32, %c0_i32_0 : i32, i32, i32
  }
}

module attributes {stable_mosaic.version = 11 : i64} {
  func.func @_bn_relu_nchw_kernel(%arg0: i32, %arg1: i32, %arg2: memref<1x256x8xbf16, #tpu.memory_space<vmem>>, %arg3: memref<1x8xf32, #tpu.memory_space<vmem>>, %arg4: memref<1x8xf32, #tpu.memory_space<vmem>>, %arg5: memref<1x8x256xf32, #tpu.memory_space<vmem>>) attributes {dimension_semantics = [#tpu.dimension_semantics<parallel>, #tpu.dimension_semantics<parallel>], iteration_bounds = array<i64: 2, 1>, scalar_prefetch = 0 : i64, scratch_operands = 0 : i64, tpu.core_type = #tpu.core_type<tc>, window_params = [{transform_indices = @transform_0, window_bounds = array<i64: 1, 256, 8>}, {pipeline_mode = #tpu.pipeline_mode<synchronous>, transform_indices = @transform_1, window_bounds = array<i64: 1, 8>}, {pipeline_mode = #tpu.pipeline_mode<synchronous>, transform_indices = @transform_2, window_bounds = array<i64: 1, 8>}, {transform_indices = @transform_3, window_bounds = array<i64: 1, 8, 256>}]} {
    %c0 = arith.constant 0 : index
    %c0_0 = arith.constant 0 : index
    %c0_1 = arith.constant 0 : index
    %0 = vector.load %arg2[%c0, %c0_0, %c0_1] : memref<1x256x8xbf16, #tpu.memory_space<vmem>>, vector<1x256x8xbf16>
    %1 = vector.shape_cast %0 : vector<1x256x8xbf16> to vector<256x8xbf16>
    %2 = arith.extf %1 : vector<256x8xbf16> to vector<256x8xf32>
    %c0_2 = arith.constant 0 : index
    %c0_3 = arith.constant 0 : index
    %3 = vector.load %arg3[%c0_2, %c0_3] : memref<1x8xf32, #tpu.memory_space<vmem>>, vector<1x8xf32>
    %4 = vector.broadcast %3 : vector<1x8xf32> to vector<256x8xf32>
    %5 = arith.mulf %2, %4 : vector<256x8xf32>
    %c0_4 = arith.constant 0 : index
    %c0_5 = arith.constant 0 : index
    %6 = vector.load %arg4[%c0_4, %c0_5] : memref<1x8xf32, #tpu.memory_space<vmem>>, vector<1x8xf32>
    %7 = vector.broadcast %6 : vector<1x8xf32> to vector<256x8xf32>
    %8 = arith.addf %5, %7 : vector<256x8xf32>
    %cst = arith.constant 0.000000e+00 : f32
    %9 = vector.broadcast %cst : f32 to vector<256x8xf32>
    %10 = arith.maximumf %8, %9 : vector<256x8xf32>
    %11 = tpu.transpose %10, [1, 0] : vector<256x8xf32> -> vector<8x256xf32>
    %c0_6 = arith.constant 0 : index
    %c0_7 = arith.constant 0 : index
    %c0_8 = arith.constant 0 : index
    %12 = vector.load %arg5[%c0_6, %c0_7, %c0_8] : memref<1x8x256xf32, #tpu.memory_space<vmem>>, vector<1x8x256xf32>
    %13 = vector.shape_cast %12 : vector<1x8x256xf32> to vector<8x256xf32>
    %14 = vector.shape_cast %11 : vector<8x256xf32> to vector<1x8x256xf32>
    tpu.vector_store %arg5[%c0_6, %c0_7, %c0_8], %14 {strides = array<i32>} : memref<1x8x256xf32, #tpu.memory_space<vmem>>, vector<1x8x256xf32>,
    return
  }
  func.func @transform_0(%arg0: i32, %arg1: i32) -> (i32, i32, i32) {
    %c0_i32 = arith.constant 0 : i32
    %c0_i32_0 = arith.constant 0 : i32
    return %arg0, %arg1, %c0_i32 : i32, i32, i32
  }
  func.func @transform_1(%arg0: i32, %arg1: i32) -> (i32, i32) {
    %c0_i32 = arith.constant 0 : i32
    %c0_i32_0 = arith.constant 0 : i32
    %c0_i32_1 = arith.constant 0 : i32
    return %c0_i32, %c0_i32_0 : i32, i32
  }
  func.func @transform_2(%arg0: i32, %arg1: i32) -> (i32, i32) {
    %c0_i32 = arith.constant 0 : i32
    %c0_i32_0 = arith.constant 0 : i32
    %c0_i32_1 = arith.constant 0 : i32
    return %c0_i32, %c0_i32_0 : i32, i32
  }
  func.func @transform_3(%arg0: i32, %arg1: i32) -> (i32, i32, i32) {
    %c0_i32 = arith.constant 0 : i32
    %c0_i32_0 = arith.constant 0 : i32
    return %arg0, %c0_i32, %arg1 : i32, i32, i32
  }
}

</mosaic_0001>

<llo_original>
// kernel: basic_conv2d.3
$region0: #{basic_conv2d.3}
  #allocation0 [shape = 'u32[]', space=smem, size = 0x4, offset = 0x4, fixed_abs, tag = 'smem constant byte address 0x4 - core index']
  #allocation1 [shape = 'u32[144,128]{1,0:T(1,128)}', space=vmem, size = 0x12000, scoped, tag = 'internal scratch']
  %s0 = inlined_call_operand.vmem [shape: bf16[2,256,8], index: 0, kind: input, shape index: {}]
  %s1 = inlined_call_operand.vmem [shape: f32[1,8], index: 1, kind: input, shape index: {}]
  %s2 = inlined_call_operand.vmem [shape: f32[1,8], index: 2, kind: input, shape index: {}]
  %s3 = inlined_call_operand.vmem [shape: f32[2,8,256], index: 3, kind: output, shape index: {}]
  %s4 = sld [smem:[#allocation0]]
  $region45: #{basic_conv2d.3} parent=0
    _
  %s6 = ssub.s32 1, %s4
  %s7 = scalar_select 0, %s6, %s4
  loop: start=0, step=1, limit=4
  $region2: #{basic_conv2d.3} parent=0 // loop_pre_header
    _
  $region3: #{basic_conv2d.3} parent=0 // loop_header
    %s9 = sphi 0, %s13
    %p10 = scmp.ge.s32.totalorder %s9, 4
    %s16 = sphi 0, %s28
    %s17 = sphi 0, %s24
    %s18 = sphi 0, %s16
    %s19 = sphi 0, %s17
    %s20 = sphi 0, %s18
    %s21 = sphi 0, %s19
    %s33 = sphi 0, %s35
    %s36 = sphi 0, %s33
    %s37 = sphi 0, %s36
    %s53 = sphi 0, %s37
    %s57 = sphi 0, %s57
    %s59 = sphi 0, %s57
    %s60 = sphi 0, %s59
    %s74 = sphi 0, %s60
    %s78 = sphi 0, %s78
    %s80 = sphi 0, %s78
    %s81 = sphi 0, %s80
    %s95 = sphi 0, %s81
    %s103 = sphi 0, %s105
    %s106 = sphi 0, %s103
    %s107 = sphi 0, %s106
    %s123 = sphi 0, %s107
  $region4: #{basic_conv2d.3} parent=0 // loop_header_branch
    %12 = sbr.rel (%p10) target = $region8
  $region5: #{basic_conv2d.3} parent=0 // loop_body
    %s14 = ssub.s32 %s9, 1
    %s15 = ssub.s32 %s9, 2
    %s22 = sadd.s32 1, %s17
    %p23 = scmp.ge.s32.totalorder %s22, 1
    %s24 = scalar_select %p23, 0, %s22
    %s25 = sadd.s32 1, %s16
    %s26 = scalar_select %p23, %s25, %s16
    %p27 = scmp.ge.s32.totalorder %s26, 2
    %s28 = scalar_select %p27, 0, %s26
    %s29 = ssub.s32 %s16, %s28
    %s30 = ssub.s32 %s17, %s24
    %s31 = sor.u32 %s29, %s30
    %p32 = scmp.eq.s32.totalorder %s31, 0
    %s34 = sadd.s32 %s33, 1
    %s35 = scalar_select %p32, %s33, %s34
    %p38 = pneg %p32
    %p39 = scmp.eq.s32.totalorder %s9, 1
    %p40 = por %p38, %p39
    %p41 = scmp.ne.s32.totalorder %s33, %s36
    %p42 = scmp.eq.s32.totalorder %s9, 0
    %p43 = por %p41, %p42
    %p44 = scmp.ne.s32.totalorder %s33, %s36
    %p45 = scmp.eq.s32.totalorder %s14, 1
    %p46 = por %p44, %p45
    %p47 = scmp.ne.s32.totalorder %s36, %s37
    %p48 = scmp.eq.s32.totalorder %s14, 0
    %p49 = por %p47, %p48
    %p50 = scmp.ne.s32.totalorder %s36, %s37
    %p51 = scmp.eq.s32.totalorder %s15, 1
    %p52 = por %p50, %p51
    %p54 = scmp.ne.s32.totalorder %s37, %s53
    %p55 = scmp.eq.s32.totalorder %s15, 0
    %p56 = por %p54, %p55
    %s58 = sadd.s32 %s57, 1
    %p61 = scmp.eq.s32.totalorder %s9, 1
    %p62 = scmp.ne.s32.totalorder %s57, %s59
    %p63 = scmp.eq.s32.totalorder %s9, 0
    %p64 = por %p62, %p63
    %p65 = scmp.ne.s32.totalorder %s57, %s59
    %p66 = scmp.eq.s32.totalorder %s14, 1
    %p67 = por %p65, %p66
    %p68 = scmp.ne.s32.totalorder %s59, %s60
    %p69 = scmp.eq.s32.totalorder %s14, 0
    %p70 = por %p68, %p69
    %p71 = scmp.ne.s32.totalorder %s59, %s60
    %p72 = scmp.eq.s32.totalorder %s15, 1
    %p73 = por %p71, %p72
    %p75 = scmp.ne.s32.totalorder %s60, %s74
    %p76 = scmp.eq.s32.totalorder %s15, 0
    %p77 = por %p75, %p76
    %s79 = sadd.s32 %s78, 1
    %p82 = scmp.eq.s32.totalorder %s9, 1
    %p83 = scmp.ne.s32.totalorder %s78, %s80
    %p84 = scmp.eq.s32.totalorder %s9, 0
    %p85 = por %p83, %p84
    %p86 = scmp.ne.s32.totalorder %s78, %s80
    %p87 = scmp.eq.s32.totalorder %s14, 1
    %p88 = por %p86, %p87
    %p89 = scmp.ne.s32.totalorder %s80, %s81
    %p90 = scmp.eq.s32.totalorder %s14, 0
    %p91 = por %p89, %p90
    %p92 = scmp.ne.s32.totalorder %s80, %s81
    %p93 = scmp.eq.s32.totalorder %s15, 1
    %p94 = por %p92, %p93
    %p96 = scmp.ne.s32.totalorder %s81, %s95
    %p97 = scmp.eq.s32.totalorder %s15, 0
    %p98 = por %p96, %p97
    %s99 = ssub.s32 %s16, %s28
    %s100 = ssub.s32 %s17, %s24
    %s101 = sor.u32 %s99, %s100
    %p102 = scmp.eq.s32.totalorder %s101, 0
    %s104 = sadd.s32 %s103, 1
    %s105 = scalar_select %p102, %s103, %s104
    %p108 = pneg %p102
    %p109 = scmp.eq.s32.totalorder %s9, 1
    %p110 = por %p108, %p109
    %p111 = scmp.ne.s32.totalorder %s103, %s106
    %p112 = scmp.eq.s32.totalorder %s9, 0
    %p113 = por %p111, %p112
    %p114 = scmp.ne.s32.totalorder %s103, %s106
    %p115 = scmp.eq.s32.totalorder %s14, 1
    %p116 = por %p114, %p115
    %p117 = scmp.ne.s32.totalorder %s106, %s107
    %p118 = scmp.eq.s32.totalorder %s14, 0
    %p119 = por %p117, %p118
    %p120 = scmp.ne.s32.totalorder %s106, %s107
    %p121 = scmp.eq.s32.totalorder %s15, 1
    %p122 = por %p120, %p121
    %p124 = scmp.ne.s32.totalorder %s107, %s123
    %p125 = scmp.eq.s32.totalorder %s15, 0
    %p126 = por %p124, %p125
    %p127 = scmp.le.s32.totalorder 1, %s9
    %p128 = scmp.lt.s32.totalorder %s9, 3
    %p129 = pnand %p127, %p128
    %p130 = pneg %p129
    // Predicated region
    $region9: #{basic_conv2d.3} parent=5 // pred_check
      _
    $region10: #{basic_conv2d.3} parent=5 // pred_check_branch
      %132 = sbr.rel (%p129) target = $region12
    $region11: #{basic_conv2d.3} parent=5 // pred_region
      %s133 = ssub.s32 %s9, 1
      // Predicated region
      $region13: #{basic_conv2d.3} parent=11 // pred_check
        %p134 = pneg %p70
      $region14: #{basic_conv2d.3} parent=11 // pred_check_branch
        %136 = sbr.rel (%p134) target = $region16
      $region15: #{basic_conv2d.3} parent=11 // pred_region
        _
      $region16: #{basic_conv2d.3} parent=11 // pred_fallthru
        _
      // Predicated region
      $region17: #{basic_conv2d.3} parent=11 // pred_check
        %p137 = pneg %p91
      $region18: #{basic_conv2d.3} parent=11 // pred_check_branch
        %139 = sbr.rel (%p137) target = $region20
      $region19: #{basic_conv2d.3} parent=11 // pred_region
        _
      $region20: #{basic_conv2d.3} parent=11 // pred_fallthru
        _
    $region12: #{basic_conv2d.3} parent=5 // pred_fallthru
      _
    %p140 = scmp.lt.s32.totalorder %s9, 2
    // Predicated region
    $region21: #{basic_conv2d.3} parent=5 // pred_check
      %p141 = pneg %p140
    $region22: #{basic_conv2d.3} parent=5 // pred_check_branch
      %143 = sbr.rel (%p141) target = $region24
    $region23: #{basic_conv2d.3} parent=5 // pred_region
      // Predicated region
      $region25: #{basic_conv2d.3} parent=23 // pred_check
        %p144 = pneg %p43
      $region26: #{basic_conv2d.3} parent=23 // pred_check_branch
        %146 = sbr.rel (%p144) target = $region28
      $region27: #{basic_conv2d.3} parent=23 // pred_region
        %s147 = smul.u32 32, %s17
        %p148 = scmp.lt.s32.totalorder %s16, 1
        %s149 = scalar_select %p148, %s16, 1
        %p150 = scmp.lt.s32.totalorder %s147, 31
        %s151 = scalar_select %p150, %s147, 31
        %s152 = smul.addr %s149, 32
        %s153 = sadd.s32 %s151, %s152
        %s154 = smul.addr %s153, 4
        %s155 = scalar_lea.vmem %s0, %s154
        %s156 = smul.u32 32, %s17
      $region28: #{basic_conv2d.3} parent=23 // pred_fallthru
        _
    $region24: #{basic_conv2d.3} parent=5 // pred_fallthru
      _
    %p157 = scmp.le.s32.totalorder 1, %s9
    %p158 = scmp.lt.s32.totalorder %s9, 3
    %p159 = pnand %p157, %p158
    %p160 = pneg %p159
    // Predicated region
    $region29: #{basic_conv2d.3} parent=5 // pred_check
      _
    $region30: #{basic_conv2d.3} parent=5 // pred_check_branch
      %162 = sbr.rel (%p159) target = $region32
    $region31: #{basic_conv2d.3} parent=5 // pred_region
      %s163 = ssub.s32 %s9, 1
      %s164 = smul.u32 32, %s19
      %p165 = scmp.lt.s32.totalorder %s18, 1
      %s166 = scalar_select %p165, %s18, 1
      %p167 = scmp.lt.s32.totalorder %s164, 31
      %s168 = scalar_select %p167, %s164, 31
      %s169 = smul.addr %s166, 32
      %s170 = sadd.s32 %s168, %s169
      %s171 = smul.addr %s170, 4
      %s172 = scalar_lea.vmem %s0, %s171
      %p173 = pneg %p49
      %p174 = pneg %p46
      %p175 = pneg %p70
      %p176 = pneg %p67
      %p177 = pneg %p91
      %p178 = pneg %p88
      %p179 = pneg %p119
      %p180 = pneg %p116
      %s181 = smul.u32 2, %s19
      %p182 = scmp.lt.s32.totalorder %s18, 1
      %s183 = scalar_select %p182, %s18, 1
      %p184 = scmp.lt.s32.totalorder %s181, 1
      %s185 = scalar_select %p184, %s181, 1
      %s186 = smul.addr %s183, 2
      %s187 = sadd.s32 %s185, %s186
      %s188 = smul.addr %s187, 8
      %s189 = scalar_lea.vmem %s3, %s188
      %s190 = smul.u32 32, %s19
      %p191 = scmp.lt.s32.totalorder %s18, 1
      %s192 = scalar_select %p191, %s18, 1
      %p193 = scmp.lt.s32.totalorder %s190, 31
      %s194 = scalar_select %p193, %s190, 31
      %s195 = smul.addr %s192, 32
      %s196 = sadd.s32 %s194, %s195
      %s197 = smul.addr %s196, 4
      %s198 = scalar_lea.vmem %s0, %s197
      %s199 = smul.u32 32, %s19
      %s200 = smul.u32 2, %s19
      %p201 = scmp.lt.s32.totalorder %s18, 1
      %s202 = scalar_select %p201, %s18, 1
      %p203 = scmp.lt.s32.totalorder %s200, 1
      %s204 = scalar_select %p203, %s200, 1
      %s205 = smul.addr %s202, 2
      %s206 = sadd.s32 %s204, %s205
      %s207 = smul.addr %s206, 8
      %s208 = scalar_lea.vmem %s3, %s207
      %s209 = smul.u32 2, %s19
      %v210 = vld [vmem:[%s198] sm:$0xf]
      %v211 = vld [vmem:[%s198 + $0x4] sm:$0xf]
      %v212 = vld [vmem:[%s198 + $0x8] sm:$0xf]
      %v213 = vld [vmem:[%s198 + $0xc] sm:$0xf]
      %v214 = vld [vmem:[%s198 + $0x10] sm:$0xf]
      %v215 = vld [vmem:[%s198 + $0x14] sm:$0xf]
      %v216 = vld [vmem:[%s198 + $0x18] sm:$0xf]
      %v217 = vld [vmem:[%s198 + $0x1c] sm:$0xf]
      %v218 = vld [vmem:[%s198 + $0x20] sm:$0xf]
      %v219 = vld [vmem:[%s198 + $0x24] sm:$0xf]
      %v220 = vld [vmem:[%s198 + $0x28] sm:$0xf]
      %v221 = vld [vmem:[%s198 + $0x2c] sm:$0xf]
      %v222 = vld [vmem:[%s198 + $0x30] sm:$0xf]
      %v223 = vld [vmem:[%s198 + $0x34] sm:$0xf]
      %v224 = vld [vmem:[%s198 + $0x38] sm:$0xf]
      %v225 = vld [vmem:[%s198 + $0x3c] sm:$0xf]
      %v226 = vld [vmem:[%s198 + $0x40] sm:$0xf]
      %v227 = vld [vmem:[%s198 + $0x44] sm:$0xf]
      %v228 = vld [vmem:[%s198 + $0x48] sm:$0xf]
      %v229 = vld [vmem:[%s198 + $0x4c] sm:$0xf]
      %v230 = vld [vmem:[%s198 + $0x50] sm:$0xf]
      %v231 = vld [vmem:[%s198 + $0x54] sm:$0xf]
      %v232 = vld [vmem:[%s198 + $0x58] sm:$0xf]
      %v233 = vld [vmem:[%s198 + $0x5c] sm:$0xf]
      %v234 = vld [vmem:[%s198 + $0x60] sm:$0xf]
      %v235 = vld [vmem:[%s198 + $0x64] sm:$0xf]
      %v236 = vld [vmem:[%s198 + $0x68] sm:$0xf]
      %v237 = vld [vmem:[%s198 + $0x6c] sm:$0xf]
      %v238 = vld [vmem:[%s198 + $0x70] sm:$0xf]
      %v239 = vld [vmem:[%s198 + $0x74] sm:$0xf]
      %v240 = vld [vmem:[%s198 + $0x78] sm:$0xf]
      %v241 = vld [vmem:[%s198 + $0x7c] sm:$0xf]
      %v242 = vunpack.c.l.bf16 %v210
      %v243 = vunpack.c.l.bf16 %v211
      %v244 = vunpack.c.l.bf16 %v212
      %v245 = vunpack.c.l.bf16 %v213
      %v246 = vunpack.c.l.bf16 %v214
      %v247 = vunpack.c.l.bf16 %v215
      %v248 = vunpack.c.l.bf16 %v216
      %v249 = vunpack.c.l.bf16 %v217
      %v250 = vunpack.c.l.bf16 %v218
      %v251 = vunpack.c.l.bf16 %v219
      %v252 = vunpack.c.l.bf16 %v220
      %v253 = vunpack.c.l.bf16 %v221
      %v254 = vunpack.c.l.bf16 %v222
      %v255 = vunpack.c.l.bf16 %v223
      %v256 = vunpack.c.l.bf16 %v224
      %v257 = vunpack.c.l.bf16 %v225
      %v258 = vunpack.c.l.bf16 %v226
      %v259 = vunpack.c.l.bf16 %v227
      %v260 = vunpack.c.l.bf16 %v228
      %v261 = vunpack.c.l.bf16 %v229
      %v262 = vunpack.c.l.bf16 %v230
      %v263 = vunpack.c.l.bf16 %v231
      %v264 = vunpack.c.l.bf16 %v232
      %v265 = vunpack.c.l.bf16 %v233
      %v266 = vunpack.c.l.bf16 %v234
      %v267 = vunpack.c.l.bf16 %v235
      %v268 = vunpack.c.l.bf16 %v236
      %v269 = vunpack.c.l.bf16 %v237
      %v270 = vunpack.c.l.bf16 %v238
      %v271 = vunpack.c.l.bf16 %v239
      %v272 = vunpack.c.l.bf16 %v240
      %v273 = vunpack.c.l.bf16 %v241
      %v274 = vld [vmem:[%s1] sm:$0x1]
      %v276 = vlaneseq
      %v277 = vshrl.u32 %v276, 7
      %v278 = vsub.s32 0, %v277
      %v279 = vrot.slane %v274, %v278
      %v281 = vmul.f32 %v242, %v279
      %v282 = vmul.f32 %v243, %v279
      %v283 = vmul.f32 %v244, %v279
      %v284 = vmul.f32 %v245, %v279
      %v285 = vmul.f32 %v246, %v279
      %v286 = vmul.f32 %v247, %v279
      %v287 = vmul.f32 %v248, %v279
      %v288 = vmul.f32 %v249, %v279
      %v289 = vmul.f32 %v250, %v279
      %v290 = vmul.f32 %v251, %v279
      %v291 = vmul.f32 %v252, %v279
      %v292 = vmul.f32 %v253, %v279
      %v293 = vmul.f32 %v254, %v279
      %v294 = vmul.f32 %v255, %v279
      %v295 = vmul.f32 %v256, %v279
      %v296 = vmul.f32 %v257, %v279
      %v297 = vmul.f32 %v258, %v279
      %v298 = vmul.f32 %v259, %v279
      %v299 = vmul.f32 %v260, %v279
      %v300 = vmul.f32 %v261, %v279
      %v301 = vmul.f32 %v262, %v279
      %v302 = vmul.f32 %v263, %v279
      %v303 = vmul.f32 %v264, %v279
      %v304 = vmul.f32 %v265, %v279
      %v305 = vmul.f32 %v266, %v279
      %v306 = vmul.f32 %v267, %v279
      %v307 = vmul.f32 %v268, %v279
      %v308 = vmul.f32 %v269, %v279
      %v309 = vmul.f32 %v270, %v279
      %v310 = vmul.f32 %v271, %v279
      %v311 = vmul.f32 %v272, %v279
      %v312 = vmul.f32 %v273, %v279
      %v313 = vld [vmem:[%s2] sm:$0x1]
      %v315 = vlaneseq
      %v316 = vshrl.u32 %v315, 7
      %v317 = vsub.s32 0, %v316
      %v318 = vrot.slane %v313, %v317
      %v320 = vadd.f32 %v281, %v318
      %v321 = vadd.f32 %v282, %v318
      %v322 = vadd.f32 %v283, %v318
      %v323 = vadd.f32 %v284, %v318
      %v324 = vadd.f32 %v285, %v318
      %v325 = vadd.f32 %v286, %v318
      %v326 = vadd.f32 %v287, %v318
      %v327 = vadd.f32 %v288, %v318
      %v328 = vadd.f32 %v289, %v318
      %v329 = vadd.f32 %v290, %v318
      %v330 = vadd.f32 %v291, %v318
      %v331 = vadd.f32 %v292, %v318
      %v332 = vadd.f32 %v293, %v318
      %v333 = vadd.f32 %v294, %v318
      %v334 = vadd.f32 %v295, %v318
      %v335 = vadd.f32 %v296, %v318
      %v336 = vadd.f32 %v297, %v318
      %v337 = vadd.f32 %v298, %v318
      %v338 = vadd.f32 %v299, %v318
      %v339 = vadd.f32 %v300, %v318
      %v340 = vadd.f32 %v301, %v318
      %v341 = vadd.f32 %v302, %v318
      %v342 = vadd.f32 %v303, %v318
      %v343 = vadd.f32 %v304, %v318
      %v344 = vadd.f32 %v305, %v318
      %v345 = vadd.f32 %v306, %v318
      %v346 = vadd.f32 %v307, %v318
      %v347 = vadd.f32 %v308, %v318
      %v348 = vadd.f32 %v309, %v318
      %v349 = vadd.f32 %v310, %v318
      %v350 = vadd.f32 %v311, %v318
      %v351 = vadd.f32 %v312, %v318
      %v352 = vmax.f32 %v320, 0.0
      %v353 = vmax.f32 %v321, 0.0
      %v354 = vmax.f32 %v322, 0.0
      %v355 = vmax.f32 %v323, 0.0
      %v356 = vmax.f32 %v324, 0.0
      %v357 = vmax.f32 %v325, 0.0
      %v358 = vmax.f32 %v326, 0.0
      %v359 = vmax.f32 %v327, 0.0
      %v360 = vmax.f32 %v328, 0.0
      %v361 = vmax.f32 %v329, 0.0
      %v362 = vmax.f32 %v330, 0.0
      %v363 = vmax.f32 %v331, 0.0
      %v364 = vmax.f32 %v332, 0.0
      %v365 = vmax.f32 %v333, 0.0
      %v366 = vmax.f32 %v334, 0.0
      %v367 = vmax.f32 %v335, 0.0
      %v368 = vmax.f32 %v336, 0.0
      %v369 = vmax.f32 %v337, 0.0
      %v370 = vmax.f32 %v338, 0.0
      %v371 = vmax.f32 %v339, 0.0
      %v372 = vmax.f32 %v340, 0.0
      %v373 = vmax.f32 %v341, 0.0
      %v374 = vmax.f32 %v342, 0.0
      %v375 = vmax.f32 %v343, 0.0
      %v376 = vmax.f32 %v344, 0.0
      %v377 = vmax.f32 %v345, 0.0
      %v378 = vmax.f32 %v346, 0.0
      %v379 = vmax.f32 %v347, 0.0
      %v380 = vmax.f32 %v348, 0.0
      %v381 = vmax.f32 %v349, 0.0
      %v382 = vmax.f32 %v350, 0.0
      %v383 = vmax.f32 %v351, 0.0
      %384 = vxpose.xlu0.b32.start [1/16] %v352, 128
      %385 = vxpose.xlu0.b32.cont [2/16] %v353, 128
      %386 = vxpose.xlu0.b32.cont [3/16] %v354, 128
      %387 = vxpose.xlu0.b32.cont [4/16] %v355, 128
      %388 = vxpose.xlu0.b32.cont [5/16] %v356, 128
      %389 = vxpose.xlu0.b32.cont [6/16] %v357, 128
      %390 = vxpose.xlu0.b32.cont [7/16] %v358, 128
      %391 = vxpose.xlu0.b32.cont [8/16] %v359, 128
      %392 = vxpose.xlu0.b32.cont [9/16] %v360, 128
      %393 = vxpose.xlu0.b32.cont [10/16] %v361, 128
      %394 = vxpose.xlu0.b32.cont [11/16] %v362, 128
      %395 = vxpose.xlu0.b32.cont [12/16] %v363, 128
      %396 = vxpose.xlu0.b32.cont [13/16] %v364, 128
      %397 = vxpose.xlu0.b32.cont [14/16] %v365, 128
      %398 = vxpose.xlu0.b32.cont [15/16] %v366, 128
      %399 = vxpose.xlu0.b32.end [16/16] %v367, 128
      %v400 = vpop.trf.xlu0
      %v401 = vpop.trf.xlu0
      %v402 = vpop.trf.xlu0
      %v403 = vpop.trf.xlu0
      %v404 = vpop.trf.xlu0
      %v405 = vpop.trf.xlu0
      %v406 = vpop.trf.xlu0
      %v407 = vpop.trf.xlu0
      %v408 = vpop.trf.xlu0
      %v409 = vpop.trf.xlu0
      %v410 = vpop.trf.xlu0
      %v411 = vpop.trf.xlu0
      %v412 = vpop.trf.xlu0
      %v413 = vpop.trf.xlu0
      %v414 = vpop.trf.xlu0
      %v415 = vpop.trf.xlu0
      %416 = vxpose.xlu0.b32.start [1/16] %v368, 128
      %417 = vxpose.xlu0.b32.cont [2/16] %v369, 128
      %418 = vxpose.xlu0.b32.cont [3/16] %v370, 128
      %419 = vxpose.xlu0.b32.cont [4/16] %v371, 128
      %420 = vxpose.xlu0.b32.cont [5/16] %v372, 128
      %421 = vxpose.xlu0.b32.cont [6/16] %v373, 128
      %422 = vxpose.xlu0.b32.cont [7/16] %v374, 128
      %423 = vxpose.xlu0.b32.cont [8/16] %v375, 128
      %424 = vxpose.xlu0.b32.cont [9/16] %v376, 128
      %425 = vxpose.xlu0.b32.cont [10/16] %v377, 128
      %426 = vxpose.xlu0.b32.cont [11/16] %v378, 128
      %427 = vxpose.xlu0.b32.cont [12/16] %v379, 128
      %428 = vxpose.xlu0.b32.cont [13/16] %v380, 128
      %429 = vxpose.xlu0.b32.cont [14/16] %v381, 128
      %430 = vxpose.xlu0.b32.cont [15/16] %v382, 128
      %431 = vxpose.xlu0.b32.end [16/16] %v383, 128
      %v432 = vpop.trf.xlu0
      %v433 = vpop.trf.xlu0
      %v434 = vpop.trf.xlu0
      %v435 = vpop.trf.xlu0
      %v436 = vpop.trf.xlu0
      %v437 = vpop.trf.xlu0
      %v438 = vpop.trf.xlu0
      %v439 = vpop.trf.xlu0
      %v440 = vpop.trf.xlu0
      %v441 = vpop.trf.xlu0
      %v442 = vpop.trf.xlu0
      %v443 = vpop.trf.xlu0
      %v444 = vpop.trf.xlu0
      %v445 = vpop.trf.xlu0
      %v446 = vpop.trf.xlu0
      %v447 = vpop.trf.xlu0
      %448 = vst [vmem:[%s208] sm:$0xff] %v400
      %449 = vst [vmem:[%s208 + $0x8] sm:$0xff] %v432
      %s450 = smul.u32 2, %s19
      %p451 = scmp.lt.s32.totalorder %s18, 1
      %s452 = scalar_select %p451, %s18, 1
      %p453 = scmp.lt.s32.totalorder %s450, 1
      %s454 = scalar_select %p453, %s450, 1
      %s455 = smul.addr %s452, 2
      %s456 = sadd.s32 %s454, %s455
      %s457 = smul.addr %s456, 8
      %s458 = scalar_lea.vmem %s3, %s457
      // Predicated region
      $region33: #{basic_conv2d.3} parent=31 // pred_check
        %p459 = pneg %p116
      $region34: #{basic_conv2d.3} parent=31 // pred_check_branch
        %461 = sbr.rel (%p459) target = $region36
      $region35: #{basic_conv2d.3} parent=31 // pred_region
        %s462 = smul.u32 2, %s19
      $region36: #{basic_conv2d.3} parent=31 // pred_fallthru
        _
    $region32: #{basic_conv2d.3} parent=5 // pred_fallthru
      _
    %p463 = scmp.le.s32.totalorder 2, %s9
    // Predicated region
    $region37: #{basic_conv2d.3} parent=5 // pred_check
      %p464 = pneg %p463
    $region38: #{basic_conv2d.3} parent=5 // pred_check_branch
      %466 = sbr.rel (%p464) target = $region40
    $region39: #{basic_conv2d.3} parent=5 // pred_region
      %s467 = ssub.s32 %s9, 2
      // Predicated region
      $region41: #{basic_conv2d.3} parent=39 // pred_check
        %p468 = pneg %p122
      $region42: #{basic_conv2d.3} parent=39 // pred_check_branch
        %470 = sbr.rel (%p468) target = $region44
      $region43: #{basic_conv2d.3} parent=39 // pred_region
        %s471 = smul.u32 2, %s21
        %p472 = scmp.lt.s32.totalorder %s20, 1
        %s473 = scalar_select %p472, %s20, 1
        %p474 = scmp.lt.s32.totalorder %s471, 1
        %s475 = scalar_select %p474, %s471, 1
        %s476 = smul.addr %s473, 2
        %s477 = sadd.s32 %s475, %s476
        %s478 = smul.addr %s477, 8
        %s479 = scalar_lea.vmem %s3, %s478
      $region44: #{basic_conv2d.3} parent=39 // pred_fallthru
        _
    $region40: #{basic_conv2d.3} parent=5 // pred_fallthru
      _
  $region6: #{basic_conv2d.3} parent=0 // loop_footer
    %s13 = sadd.s32 1, %s9
  $region7: #{basic_conv2d.3} parent=0 // loop_footer_branch
    %8 = sbr.rel target = $region3
  $region8: #{basic_conv2d.3} parent=0 // loop_exit
    _

// kernel: basic_conv2d.2
$region0: #{basic_conv2d.2}
  #allocation0 [shape = 'u32[]', space=smem, size = 0x4, offset = 0x4, fixed_abs, tag = 'smem constant byte address 0x4 - core index']
  #allocation1 [shape = 'u32[144,128]{1,0:T(1,128)}', space=vmem, size = 0x12000, scoped, tag = 'internal scratch']
  %s0 = inlined_call_operand.vmem [shape: bf16[2,256,36], index: 0, kind: input, shape index: {}]
  %s1 = inlined_call_operand.vmem [shape: bf16[36,8], index: 1, kind: input, shape index: {}]
  %s2 = inlined_call_operand.vmem [shape: bf16[2,256,8], index: 2, kind: output, shape index: {0}]
  %s3 = inlined_call_operand.vmem [shape: f32[2,2,8], index: 3, kind: output, shape index: {1}]
  %4 = xla_tuple %s2, %s3
  %s5 = sld [smem:[#allocation0]]
  $region49: #{basic_conv2d.2} parent=0
    _
  %s7 = ssub.s32 1, %s5
  %s8 = scalar_select 0, %s7, %s5
  loop: start=0, step=1, limit=4
  $region2: #{basic_conv2d.2} parent=0 // loop_pre_header
    _
  $region3: #{basic_conv2d.2} parent=0 // loop_header
    %s10 = sphi 0, %s14
    %p11 = scmp.ge.s32.totalorder %s10, 4
    %s17 = sphi 0, %s29
    %s18 = sphi 0, %s25
    %s19 = sphi 0, %s17
    %s20 = sphi 0, %s18
    %s21 = sphi 0, %s19
    %s22 = sphi 0, %s20
    %s34 = sphi 0, %s36
    %s37 = sphi 0, %s34
    %s38 = sphi 0, %s37
    %s54 = sphi 0, %s38
    %s58 = sphi 0, %s58
    %s60 = sphi 0, %s58
    %s61 = sphi 0, %s60
    %s75 = sphi 0, %s61
    %s83 = sphi 0, %s85
    %s86 = sphi 0, %s83
    %s87 = sphi 0, %s86
    %s103 = sphi 0, %s87
    %s111 = sphi 0, %s113
    %s114 = sphi 0, %s111
    %s115 = sphi 0, %s114
    %s131 = sphi 0, %s115
  $region4: #{basic_conv2d.2} parent=0 // loop_header_branch
    %13 = sbr.rel (%p11) target = $region8
  $region5: #{basic_conv2d.2} parent=0 // loop_body
    %s15 = ssub.s32 %s10, 1
    %s16 = ssub.s32 %s10, 2
    %s23 = sadd.s32 1, %s18
    %p24 = scmp.ge.s32.totalorder %s23, 1
    %s25 = scalar_select %p24, 0, %s23
    %s26 = sadd.s32 1, %s17
    %s27 = scalar_select %p24, %s26, %s17
    %p28 = scmp.ge.s32.totalorder %s27, 2
    %s29 = scalar_select %p28, 0, %s27
    %s30 = ssub.s32 %s17, %s29
    %s31 = ssub.s32 %s18, %s25
    %s32 = sor.u32 %s30, %s31
    %p33 = scmp.eq.s32.totalorder %s32, 0
    %s35 = sadd.s32 %s34, 1
    %s36 = scalar_select %p33, %s34, %s35
    %p39 = pneg %p33
    %p40 = scmp.eq.s32.totalorder %s10, 1
    %p41 = por %p39, %p40
    %p42 = scmp.ne.s32.totalorder %s34, %s37
    %p43 = scmp.eq.s32.totalorder %s10, 0
    %p44 = por %p42, %p43
    %p45 = scmp.ne.s32.totalorder %s34, %s37
    %p46 = scmp.eq.s32.totalorder %s15, 1
    %p47 = por %p45, %p46
    %p48 = scmp.ne.s32.totalorder %s37, %s38
    %p49 = scmp.eq.s32.totalorder %s15, 0
    %p50 = por %p48, %p49
    %p51 = scmp.ne.s32.totalorder %s37, %s38
    %p52 = scmp.eq.s32.totalorder %s16, 1
    %p53 = por %p51, %p52
    %p55 = scmp.ne.s32.totalorder %s38, %s54
    %p56 = scmp.eq.s32.totalorder %s16, 0
    %p57 = por %p55, %p56
    %s59 = sadd.s32 %s58, 1
    %p62 = scmp.eq.s32.totalorder %s10, 1
    %p63 = scmp.ne.s32.totalorder %s58, %s60
    %p64 = scmp.eq.s32.totalorder %s10, 0
    %p65 = por %p63, %p64
    %p66 = scmp.ne.s32.totalorder %s58, %s60
    %p67 = scmp.eq.s32.totalorder %s15, 1
    %p68 = por %p66, %p67
    %p69 = scmp.ne.s32.totalorder %s60, %s61
    %p70 = scmp.eq.s32.totalorder %s15, 0
    %p71 = por %p69, %p70
    %p72 = scmp.ne.s32.totalorder %s60, %s61
    %p73 = scmp.eq.s32.totalorder %s16, 1
    %p74 = por %p72, %p73
    %p76 = scmp.ne.s32.totalorder %s61, %s75
    %p77 = scmp.eq.s32.totalorder %s16, 0
    %p78 = por %p76, %p77
    %s79 = ssub.s32 %s17, %s29
    %s80 = ssub.s32 %s18, %s25
    %s81 = sor.u32 %s79, %s80
    %p82 = scmp.eq.s32.totalorder %s81, 0
    %s84 = sadd.s32 %s83, 1
    %s85 = scalar_select %p82, %s83, %s84
    %p88 = pneg %p82
    %p89 = scmp.eq.s32.totalorder %s10, 1
    %p90 = por %p88, %p89
    %p91 = scmp.ne.s32.totalorder %s83, %s86
    %p92 = scmp.eq.s32.totalorder %s10, 0
    %p93 = por %p91, %p92
    %p94 = scmp.ne.s32.totalorder %s83, %s86
    %p95 = scmp.eq.s32.totalorder %s15, 1
    %p96 = por %p94, %p95
    %p97 = scmp.ne.s32.totalorder %s86, %s87
    %p98 = scmp.eq.s32.totalorder %s15, 0
    %p99 = por %p97, %p98
    %p100 = scmp.ne.s32.totalorder %s86, %s87
    %p101 = scmp.eq.s32.totalorder %s16, 1
    %p102 = por %p100, %p101
    %p104 = scmp.ne.s32.totalorder %s87, %s103
    %p105 = scmp.eq.s32.totalorder %s16, 0
    %p106 = por %p104, %p105
    %s107 = sadd.s32 %s17, %s18
    %s108 = sadd.s32 %s29, %s25
    %s109 = ssub.s32 %s107, %s108
    %p110 = scmp.eq.s32.totalorder %s109, 0
    %s112 = sadd.s32 %s111, 1
    %s113 = scalar_select %p110, %s111, %s112
    %p116 = pneg %p110
    %p117 = scmp.eq.s32.totalorder %s10, 1
    %p118 = por %p116, %p117
    %p119 = scmp.ne.s32.totalorder %s111, %s114
    %p120 = scmp.eq.s32.totalorder %s10, 0
    %p121 = por %p119, %p120
    %p122 = scmp.ne.s32.totalorder %s111, %s114
    %p123 = scmp.eq.s32.totalorder %s15, 1
    %p124 = por %p122, %p123
    %p125 = scmp.ne.s32.totalorder %s114, %s115
    %p126 = scmp.eq.s32.totalorder %s15, 0
    %p127 = por %p125, %p126
    %p128 = scmp.ne.s32.totalorder %s114, %s115
    %p129 = scmp.eq.s32.totalorder %s16, 1
    %p130 = por %p128, %p129
    %p132 = scmp.ne.s32.totalorder %s115, %s131
    %p133 = scmp.eq.s32.totalorder %s16, 0
    %p134 = por %p132, %p133
    %p135 = scmp.le.s32.totalorder 1, %s10
    %p136 = scmp.lt.s32.totalorder %s10, 3
    %p137 = pnand %p135, %p136
    %p138 = pneg %p137
    // Predicated region
    $region9: #{basic_conv2d.2} parent=5 // pred_check
      _
    $region10: #{basic_conv2d.2} parent=5 // pred_check_branch
      %140 = sbr.rel (%p137) target = $region12
    $region11: #{basic_conv2d.2} parent=5 // pred_region
      %s141 = ssub.s32 %s10, 1
      // Predicated region
      $region13: #{basic_conv2d.2} parent=11 // pred_check
        %p142 = pneg %p71
      $region14: #{basic_conv2d.2} parent=11 // pred_check_branch
        %144 = sbr.rel (%p142) target = $region16
      $region15: #{basic_conv2d.2} parent=11 // pred_region
        _
      $region16: #{basic_conv2d.2} parent=11 // pred_fallthru
        _
    $region12: #{basic_conv2d.2} parent=5 // pred_fallthru
      _
    %p145 = scmp.lt.s32.totalorder %s10, 2
    // Predicated region
    $region17: #{basic_conv2d.2} parent=5 // pred_check
      %p146 = pneg %p145
    $region18: #{basic_conv2d.2} parent=5 // pred_check_branch
      %148 = sbr.rel (%p146) target = $region20
    $region19: #{basic_conv2d.2} parent=5 // pred_region
      // Predicated region
      $region21: #{basic_conv2d.2} parent=19 // pred_check
        %p149 = pneg %p44
      $region22: #{basic_conv2d.2} parent=19 // pred_check_branch
        %151 = sbr.rel (%p149) target = $region24
      $region23: #{basic_conv2d.2} parent=19 // pred_region
        %s152 = smul.u32 32, %s18
        %p153 = scmp.lt.s32.totalorder %s17, 1
        %s154 = scalar_select %p153, %s17, 1
        %p155 = scmp.lt.s32.totalorder %s152, 31
        %s156 = scalar_select %p155, %s152, 31
        %s157 = smul.addr %s154, 32
        %s158 = sadd.s32 %s156, %s157
        %s159 = smul.addr %s158, 4
        %s160 = scalar_lea.vmem %s0, %s159
        %s161 = smul.u32 32, %s18
      $region24: #{basic_conv2d.2} parent=19 // pred_fallthru
        _
    $region20: #{basic_conv2d.2} parent=5 // pred_fallthru
      _
    %p162 = scmp.le.s32.totalorder 1, %s10
    %p163 = scmp.lt.s32.totalorder %s10, 3
    %p164 = pnand %p162, %p163
    %p165 = pneg %p164
    // Predicated region
    $region25: #{basic_conv2d.2} parent=5 // pred_check
      _
    $region26: #{basic_conv2d.2} parent=5 // pred_check_branch
      %167 = sbr.rel (%p164) target = $region28
    $region27: #{basic_conv2d.2} parent=5 // pred_region
      %s168 = ssub.s32 %s10, 1
      %s169 = smul.u32 32, %s20
      %p170 = scmp.lt.s32.totalorder %s19, 1
      %s171 = scalar_select %p170, %s19, 1
      %p172 = scmp.lt.s32.totalorder %s169, 31
      %s173 = scalar_select %p172, %s169, 31
      %s174 = smul.addr %s171, 32
      %s175 = sadd.s32 %s173, %s174
      %s176 = smul.addr %s175, 4
      %s177 = scalar_lea.vmem %s0, %s176
      %p178 = pneg %p50
      %p179 = pneg %p47
      %p180 = pneg %p71
      %p181 = pneg %p68
      %p182 = pneg %p99
      %p183 = pneg %p96
      %s184 = smul.u32 32, %s20
      %p185 = scmp.lt.s32.totalorder %s19, 1
      %s186 = scalar_select %p185, %s19, 1
      %p187 = scmp.lt.s32.totalorder %s184, 31
      %s188 = scalar_select %p187, %s184, 31
      %s189 = smul.addr %s186, 32
      %s190 = sadd.s32 %s188, %s189
      %s191 = smul.addr %s190, 4
      %s192 = scalar_lea.vmem %s2, %s191
      %p193 = pneg %p127
      %p194 = pneg %p124
      %s195 = sadd.s32 %s19, %s20
      %p196 = scmp.lt.s32.totalorder %s195, 1
      %s197 = scalar_select %p196, %s195, 1
      %s198 = smul.addr %s197, 2
      %s199 = scalar_lea.vmem %s3, %s198
      %s200 = smul.u32 32, %s20
      %p201 = scmp.lt.s32.totalorder %s19, 1
      %s202 = scalar_select %p201, %s19, 1
      %p203 = scmp.lt.s32.totalorder %s200, 31
      %s204 = scalar_select %p203, %s200, 31
      %s205 = smul.addr %s202, 32
      %s206 = sadd.s32 %s204, %s205
      %s207 = smul.addr %s206, 4
      %s208 = scalar_lea.vmem %s0, %s207
      %s209 = smul.u32 32, %s20
      %s210 = smul.u32 32, %s20
      %p211 = scmp.lt.s32.totalorder %s19, 1
      %s212 = scalar_select %p211, %s19, 1
      %p213 = scmp.lt.s32.totalorder %s210, 31
      %s214 = scalar_select %p213, %s210, 31
      %s215 = smul.addr %s212, 32
      %s216 = sadd.s32 %s214, %s215
      %s217 = smul.addr %s216, 4
      %s218 = scalar_lea.vmem %s2, %s217
      %s219 = smul.u32 32, %s20
      %s220 = sadd.s32 %s19, %s20
      %p221 = scmp.lt.s32.totalorder %s220, 1
      %s222 = scalar_select %p221, %s220, 1
      %s223 = smul.addr %s222, 2
      %s224 = scalar_lea.vmem %s3, %s223
      %s225 = sadd.s32 %s19, %s20
      %v227 = vld [vmem:[%s208] sm:$0xf]
      %v228 = vld [vmem:[%s208 + $0x4] sm:$0xf]
      %v229 = vld [vmem:[%s208 + $0x8] sm:$0xf]
      %v230 = vld [vmem:[%s208 + $0xc] sm:$0xf]
      %v231 = vld [vmem:[%s208 + $0x10] sm:$0xf]
      %v232 = vld [vmem:[%s208 + $0x14] sm:$0xf]
      %v233 = vld [vmem:[%s208 + $0x18] sm:$0xf]
      %v234 = vld [vmem:[%s208 + $0x1c] sm:$0xf]
      %v235 = vld [vmem:[%s208 + $0x20] sm:$0xf]
      %v236 = vld [vmem:[%s208 + $0x24] sm:$0xf]
      %v237 = vld [vmem:[%s208 + $0x28] sm:$0xf]
      %v238 = vld [vmem:[%s208 + $0x2c] sm:$0xf]
      %v239 = vld [vmem:[%s208 + $0x30] sm:$0xf]
      %v240 = vld [vmem:[%s208 + $0x34] sm:$0xf]
      %v241 = vld [vmem:[%s208 + $0x38] sm:$0xf]
      %v242 = vld [vmem:[%s208 + $0x3c] sm:$0xf]
      %v243 = vld [vmem:[%s208 + $0x40] sm:$0xf]
      %v244 = vld [vmem:[%s208 + $0x44] sm:$0xf]
      %v245 = vld [vmem:[%s208 + $0x48] sm:$0xf]
      %v246 = vld [vmem:[%s208 + $0x4c] sm:$0xf]
      %v247 = vld [vmem:[%s208 + $0x50] sm:$0xf]
      %v248 = vld [vmem:[%s208 + $0x54] sm:$0xf]
      %v249 = vld [vmem:[%s208 + $0x58] sm:$0xf]
      %v250 = vld [vmem:[%s208 + $0x5c] sm:$0xf]
      %v251 = vld [vmem:[%s208 + $0x60] sm:$0xf]
      %v252 = vld [vmem:[%s208 + $0x64] sm:$0xf]
      %v253 = vld [vmem:[%s208 + $0x68] sm:$0xf]
      %v254 = vld [vmem:[%s208 + $0x6c] sm:$0xf]
      %v255 = vld [vmem:[%s208 + $0x70] sm:$0xf]
      %v256 = vld [vmem:[%s208 + $0x74] sm:$0xf]
      %v257 = vld [vmem:[%s208 + $0x78] sm:$0xf]
      %v258 = vld [vmem:[%s208 + $0x7c] sm:$0xf]
      %v259 = vld [vmem:[%s1] sm:$0xf]
      %v260 = vld [vmem:[%s1 + $0x4] sm:$0xf]
      %v261 = vld [vmem:[%s1 + $0x8] sm:$0xf]
      %v262 = vld [vmem:[%s1 + $0xc] sm:$0xf]
      %v263 = vld [vmem:[%s1 + $0x10] sm:$0x3]
      %v296 = vunpack.c.l.b16 %v227
      %v297 = vunpack.c.l.b16 %v228
      %v298 = vunpack.c.l.b16 %v229
      %v299 = vunpack.c.l.b16 %v230
      %v300 = vunpack.c.l.b16 %v231
      %v301 = vunpack.c.l.b16 %v232
      %v302 = vunpack.c.l.b16 %v233
      %v303 = vunpack.c.l.b16 %v234
      %v304 = vunpack.c.l.b16 %v235
      %v305 = vunpack.c.l.b16 %v236
      %v306 = vunpack.c.l.b16 %v237
      %v307 = vunpack.c.l.b16 %v238
      %v308 = vunpack.c.l.b16 %v239
      %v309 = vunpack.c.l.b16 %v240
      %v310 = vunpack.c.l.b16 %v241
      %v311 = vunpack.c.l.b16 %v242
      %v312 = vunpack.c.l.b16 %v243
      %v313 = vunpack.c.l.b16 %v244
      %v314 = vunpack.c.l.b16 %v245
      %v315 = vunpack.c.l.b16 %v246
      %v316 = vunpack.c.l.b16 %v247
      %v317 = vunpack.c.l.b16 %v248
      %v318 = vunpack.c.l.b16 %v249
      %v319 = vunpack.c.l.b16 %v250
      %v320 = vunpack.c.l.b16 %v251
      %v321 = vunpack.c.l.b16 %v252
      %v322 = vunpack.c.l.b16 %v253
      %v323 = vunpack.c.l.b16 %v254
      %v324 = vunpack.c.l.b16 %v255
      %v325 = vunpack.c.l.b16 %v256
      %v326 = vunpack.c.l.b16 %v257
      %v327 = vunpack.c.l.b16 %v258
      %v328 = vpack.c.b16 %v297, %v296
      %v329 = vpack.c.b16 %v299, %v298
      %v330 = vpack.c.b16 %v301, %v300
      %v331 = vpack.c.b16 %v303, %v302
      %v332 = vpack.c.b16 %v305, %v304
      %v333 = vpack.c.b16 %v307, %v306
      %v334 = vpack.c.b16 %v309, %v308
      %v335 = vpack.c.b16 %v311, %v310
      %v336 = vpack.c.b16 %v313, %v312
      %v337 = vpack.c.b16 %v315, %v314
      %v338 = vpack.c.b16 %v317, %v316
      %v339 = vpack.c.b16 %v319, %v318
      %v340 = vpack.c.b16 %v321, %v320
      %v341 = vpack.c.b16 %v323, %v322
      %v342 = vpack.c.b16 %v325, %v324
      %v343 = vpack.c.b16 %v327, %v326
      %v349 = vunpack.c.l.b16 %v259
      %v350 = vunpack.c.l.b16 %v260
      %v351 = vunpack.c.l.b16 %v261
      %v352 = vunpack.c.l.b16 %v262
      %v353 = vunpack.c.l.b16 %v263
      %v354 = vpack.c.b16 %v350, %v349
      %v355 = vpack.c.b16 %v352, %v351
      %v356 = vpack.c.b16 %v353, %v353
      %vm359 = vcmask 293888
      %v361 = vsel %vm359, %v328, 0
      %v364 = vsel %vm359, %v329, 0
      %v367 = vsel %vm359, %v330, 0
      %v370 = vsel %vm359, %v331, 0
      %v373 = vsel %vm359, %v332, 0
      %v376 = vsel %vm359, %v333, 0
      %v379 = vsel %vm359, %v334, 0
      %v382 = vsel %vm359, %v335, 0
      %v385 = vsel %vm359, %v336, 0
      %v388 = vsel %vm359, %v337, 0
      %v391 = vsel %vm359, %v338, 0
      %v394 = vsel %vm359, %v339, 0
      %v397 = vsel %vm359, %v340, 0
      %v400 = vsel %vm359, %v341, 0
      %v403 = vsel %vm359, %v342, 0
      %v406 = vsel %vm359, %v343, 0
      %vm408 = vcmask 1041408
      %v410 = vsel %vm408, %v356, 0
      %412 = vmatprep.subr.bf16.mxu0 0
      %413 = vmatpush1.bf16.msra.mxu0 %v354
      %414 = vmatprep.subr.bf16.mxu0 0
      %415 = vmatpush1.bf16.msra.mxu0 %v355
      %416 = vmatprep.subr.bf16.mxu0 0
      %417 = vmatpush1.bf16.msra.mxu0 %v410
      %418 = vmatprep.subr.bf16.mxu0 0
      %419 = vmatpush1.bf16.msra.mxu0 0
      %420 = vmatprep.subr.bf16.mxu0 0
      %421 = vmatpush1.bf16.msra.mxu0 0
      %422 = vmatprep.subr.bf16.mxu0 0
      %423 = vmatpush1.bf16.msra.mxu0 0
      %424 = vmatprep.subr.bf16.mxu0 0
      %425 = vmatpush1.bf16.msra.mxu0 0
      %426 = vmatprep.subr.bf16.mxu0 0
      %427 = vmatpush1.bf16.msra.mxu0 0
      %428 = vmatprep.subr.bf16.mxu0 0
      %429 = vmatpush1.bf16.msra.mxu0 0
      %430 = vmatprep.subr.bf16.mxu0 0
      %431 = vmatpush1.bf16.msra.mxu0 0
      %432 = vmatprep.subr.bf16.mxu0 0
      %433 = vmatpush1.bf16.msra.mxu0 0
      %434 = vmatprep.subr.bf16.mxu0 0
      %435 = vmatpush1.bf16.msra.mxu0 0
      %436 = vmatprep.subr.bf16.mxu0 0
      %437 = vmatpush1.bf16.msra.mxu0 0
      %438 = vmatprep.subr.bf16.mxu0 0
      %439 = vmatpush1.bf16.msra.mxu0 0
      %440 = vmatprep.subr.bf16.mxu0 0
      %441 = vmatpush1.bf16.msra.mxu0 0
      %442 = vmatprep.subr.bf16.mxu0 0
      %443 = vmatpush1.bf16.msra.mxu0 0
      %444 = vmatprep.mubr.bf16.mxu0 0
      %445 = vmatmul.mubr.bf16.gmra.mrb[0].mxu0 %v361
      %v446 = vpop.f32.mrb[0].mxu0
      %v447 = vadd.f32 0.0, %v446
      %v448 = vpop.f32.mrb[0].mxu0
      %v449 = vpop.f32.mrb[0].mxu0
      %v450 = vadd.f32 0.0, %v449
      %v451 = vpop.f32.mrb[0].mxu0
      %452 = vmatprep.mubr.bf16.mxu0 0
      %453 = vmatmul.mubr.bf16.gmra.mrb[0].mxu0 %v364
      %v454 = vpop.f32.mrb[0].mxu0
      %v455 = vadd.f32 0.0, %v454
      %v456 = vpop.f32.mrb[0].mxu0
      %v457 = vpop.f32.mrb[0].mxu0
      %v458 = vadd.f32 0.0, %v457
      %v459 = vpop.f32.mrb[0].mxu0
      %460 = vmatprep.mubr.bf16.mxu0 0
      %461 = vmatmul.mubr.bf16.gmra.mrb[0].mxu0 %v367
      %v462 = vpop.f32.mrb[0].mxu0
      %v463 = vadd.f32 0.0, %v462
      %v464 = vpop.f32.mrb[0].mxu0
      %v465 = vpop.f32.mrb[0].mxu0
      %v466 = vadd.f32 0.0, %v465
      %v467 = vpop.f32.mrb[0].mxu0
      %468 = vmatprep.mubr.bf16.mxu0 0
      %469 = vmatmul.mubr.bf16.gmra.mrb[0].mxu0 %v370
      %v470 = vpop.f32.mrb[0].mxu0
      %v471 = vadd.f32 0.0, %v470
      %v472 = vpop.f32.mrb[0].mxu0
      %v473 = vpop.f32.mrb[0].mxu0
      %v474 = vadd.f32 0.0, %v473
      %v475 = vpop.f32.mrb[0].mxu0
      %476 = vmatprep.mubr.bf16.mxu0 0
      %477 = vmatmul.mubr.bf16.gmra.mrb[0].mxu0 %v373
      %v478 = vpop.f32.mrb[0].mxu0
      %v479 = vadd.f32 0.0, %v478
      %v480 = vpop.f32.mrb[0].mxu0
      %v481 = vpop.f32.mrb[0].mxu0
      %v482 = vadd.f32 0.0, %v481
      %v483 = vpop.f32.mrb[0].mxu0
      %484 = vmatprep.mubr.bf16.mxu0 0
      %485 = vmatmul.mubr.bf16.gmra.mrb[0].mxu0 %v376
      %v486 = vpop.f32.mrb[0].mxu0
      %v487 = vadd.f32 0.0, %v486
      %v488 = vpop.f32.mrb[0].mxu0
      %v489 = vpop.f32.mrb[0].mxu0
      %v490 = vadd.f32 0.0, %v489
      %v491 = vpop.f32.mrb[0].mxu0
      %492 = vmatprep.mubr.bf16.mxu0 0
      %493 = vmatmul.mubr.bf16.gmra.mrb[0].mxu0 %v379
      %v494 = vpop.f32.mrb[0].mxu0
      %v495 = vadd.f32 0.0, %v494
      %v496 = vpop.f32.mrb[0].mxu0
      %v497 = vpop.f32.mrb[0].mxu0
      %v498 = vadd.f32 0.0, %v497
      %v499 = vpop.f32.mrb[0].mxu0
      %500 = vmatprep.mubr.bf16.mxu0 0
      %501 = vmatmul.mubr.bf16.gmra.mrb[0].mxu0 %v382
      %v502 = vpop.f32.mrb[0].mxu0
      %v503 = vadd.f32 0.0, %v502
      %v504 = vpop.f32.mrb[0].mxu0
      %v505 = vpop.f32.mrb[0].mxu0
      %v506 = vadd.f32 0.0, %v505
      %v507 = vpop.f32.mrb[0].mxu0
      %508 = vmatprep.mubr.bf16.mxu0 0
      %509 = vmatmul.mubr.bf16.gmra.mrb[0].mxu0 %v385
      %v510 = vpop.f32.mrb[0].mxu0
      %v511 = vadd.f32 0.0, %v510
      %v512 = vpop.f32.mrb[0].mxu0
      %v513 = vpop.f32.mrb[0].mxu0
      %v514 = vadd.f32 0.0, %v513
      %v515 = vpop.f32.mrb[0].mxu0
      %516 = vmatprep.mubr.bf16.mxu0 0
      %517 = vmatmul.mubr.bf16.gmra.mrb[0].mxu0 %v388
      %v518 = vpop.f32.mrb[0].mxu0
      %v519 = vadd.f32 0.0, %v518
      %v520 = vpop.f32.mrb[0].mxu0
      %v521 = vpop.f32.mrb[0].mxu0
      %v522 = vadd.f32 0.0, %v521
      %v523 = vpop.f32.mrb[0].mxu0
      %524 = vmatprep.mubr.bf16.mxu0 0
      %525 = vmatmul.mubr.bf16.gmra.mrb[0].mxu0 %v391
      %v526 = vpop.f32.mrb[0].mxu0
      %v527 = vadd.f32 0.0, %v526
      %v528 = vpop.f32.mrb[0].mxu0
      %v529 = vpop.f32.mrb[0].mxu0
      %v530 = vadd.f32 0.0, %v529
      %v531 = vpop.f32.mrb[0].mxu0
      %532 = vmatprep.mubr.bf16.mxu0 0
      %533 = vmatmul.mubr.bf16.gmra.mrb[0].mxu0 %v394
      %v534 = vpop.f32.mrb[0].mxu0
      %v535 = vadd.f32 0.0, %v534
      %v536 = vpop.f32.mrb[0].mxu0
      %v537 = vpop.f32.mrb[0].mxu0
      %v538 = vadd.f32 0.0, %v537
      %v539 = vpop.f32.mrb[0].mxu0
      %540 = vmatprep.mubr.bf16.mxu0 0
      %541 = vmatmul.mubr.bf16.gmra.mrb[0].mxu0 %v397
      %v542 = vpop.f32.mrb[0].mxu0
      %v543 = vadd.f32 0.0, %v542
      %v544 = vpop.f32.mrb[0].mxu0
      %v545 = vpop.f32.mrb[0].mxu0
      %v546 = vadd.f32 0.0, %v545
      %v547 = vpop.f32.mrb[0].mxu0
      %548 = vmatprep.mubr.bf16.mxu0 0
      %549 = vmatmul.mubr.bf16.gmra.mrb[0].mxu0 %v400
      %v550 = vpop.f32.mrb[0].mxu0
      %v551 = vadd.f32 0.0, %v550
      %v552 = vpop.f32.mrb[0].mxu0
      %v553 = vpop.f32.mrb[0].mxu0
      %v554 = vadd.f32 0.0, %v553
      %v555 = vpop.f32.mrb[0].mxu0
      %556 = vmatprep.mubr.bf16.mxu0 0
      %557 = vmatmul.mubr.bf16.gmra.mrb[0].mxu0 %v403
      %v558 = vpop.f32.mrb[0].mxu0
      %v559 = vadd.f32 0.0, %v558
      %v560 = vpop.f32.mrb[0].mxu0
      %v561 = vpop.f32.mrb[0].mxu0
      %v562 = vadd.f32 0.0, %v561
      %v563 = vpop.f32.mrb[0].mxu0
      %564 = vmatprep.mubr.bf16.mxu0 0
      %565 = vmatmul.mubr.bf16.gmra.mrb[0].mxu0 %v406
      %v566 = vpop.f32.mrb[0].mxu0
      %v567 = vadd.f32 0.0, %v566
      %v568 = vpop.f32.mrb[0].mxu0
      %v569 = vpop.f32.mrb[0].mxu0
      %v570 = vadd.f32 0.0, %v569
      %v571 = vpop.f32.mrb[0].mxu0
      %572 = vdwg.mxu0
      %v573 = vpack.c.bf16 %v450, %v447
      %v574 = vpack.c.bf16 %v458, %v455
      %v575 = vpack.c.bf16 %v466, %v463
      %v576 = vpack.c.bf16 %v474, %v471
      %v577 = vpack.c.bf16 %v482, %v479
      %v578 = vpack.c.bf16 %v490, %v487
      %v579 = vpack.c.bf16 %v498, %v495
      %v580 = vpack.c.bf16 %v506, %v503
      %v581 = vpack.c.bf16 %v514, %v511
      %v582 = vpack.c.bf16 %v522, %v519
      %v583 = vpack.c.bf16 %v530, %v527
      %v584 = vpack.c.bf16 %v538, %v535
      %v585 = vpack.c.bf16 %v546, %v543
      %v586 = vpack.c.bf16 %v554, %v551
      %v587 = vpack.c.bf16 %v562, %v559
      %v588 = vpack.c.bf16 %v570, %v567
      %v605 = vunpack.c.l.b16 %v573
      %v606 = vunpack.c.h.b16 %v573
      %v607 = vunpack.c.l.b16 %v574
      %v608 = vunpack.c.h.b16 %v574
      %v609 = vunpack.c.l.b16 %v575
      %v610 = vunpack.c.h.b16 %v575
      %v611 = vunpack.c.l.b16 %v576
      %v612 = vunpack.c.h.b16 %v576
      %v613 = vunpack.c.l.b16 %v577
      %v614 = vunpack.c.h.b16 %v577
      %v615 = vunpack.c.l.b16 %v578
      %v616 = vunpack.c.h.b16 %v578
      %v617 = vunpack.c.l.b16 %v579
      %v618 = vunpack.c.h.b16 %v579
      %v619 = vunpack.c.l.b16 %v580
      %v620 = vunpack.c.h.b16 %v580
      %v621 = vunpack.c.l.b16 %v581
      %v622 = vunpack.c.h.b16 %v581
      %v623 = vunpack.c.l.b16 %v582
      %v624 = vunpack.c.h.b16 %v582
      %v625 = vunpack.c.l.b16 %v583
      %v626 = vunpack.c.h.b16 %v583
      %v627 = vunpack.c.l.b16 %v584
      %v628 = vunpack.c.h.b16 %v584
      %v629 = vunpack.c.l.b16 %v585
      %v630 = vunpack.c.h.b16 %v585
      %v631 = vunpack.c.l.b16 %v586
      %v632 = vunpack.c.h.b16 %v586
      %v633 = vunpack.c.l.b16 %v587
      %v634 = vunpack.c.h.b16 %v587
      %v635 = vunpack.c.l.b16 %v588
      %v636 = vunpack.c.h.b16 %v588
      %v637 = vpack.c.b16 %v605, %v605
      %v638 = vpack.c.b16 %v606, %v606
      %v639 = vpack.c.b16 %v607, %v607
      %v640 = vpack.c.b16 %v608, %v608
      %v641 = vpack.c.b16 %v609, %v609
      %v642 = vpack.c.b16 %v610, %v610
      %v643 = vpack.c.b16 %v611, %v611
      %v644 = vpack.c.b16 %v612, %v612
      %v645 = vpack.c.b16 %v613, %v613
      %v646 = vpack.c.b16 %v614, %v614
      %v647 = vpack.c.b16 %v615, %v615
      %v648 = vpack.c.b16 %v616, %v616
      %v649 = vpack.c.b16 %v617, %v617
      %v650 = vpack.c.b16 %v618, %v618
      %v651 = vpack.c.b16 %v619, %v619
      %v652 = vpack.c.b16 %v620, %v620
      %v653 = vpack.c.b16 %v621, %v621
      %v654 = vpack.c.b16 %v622, %v622
      %v655 = vpack.c.b16 %v623, %v623
      %v656 = vpack.c.b16 %v624, %v624
      %v657 = vpack.c.b16 %v625, %v625
      %v658 = vpack.c.b16 %v626, %v626
      %v659 = vpack.c.b16 %v627, %v627
      %v660 = vpack.c.b16 %v628, %v628
      %v661 = vpack.c.b16 %v629, %v629
      %v662 = vpack.c.b16 %v630, %v630
      %v663 = vpack.c.b16 %v631, %v631
      %v664 = vpack.c.b16 %v632, %v632
      %v665 = vpack.c.b16 %v633, %v633
      %v666 = vpack.c.b16 %v634, %v634
      %v667 = vpack.c.b16 %v635, %v635
      %v668 = vpack.c.b16 %v636, %v636
      %vm701 = vcmask 60416
      %702 = vst.msk [vmem:[%s218] sm:$0xf] %vm701, %v637
      %703 = vst.msk [vmem:[%s218 + $0x4] sm:$0xf] %vm701, %v638
      %704 = vst.msk [vmem:[%s218 + $0x8] sm:$0xf] %vm701, %v639
      %705 = vst.msk [vmem:[%s218 + $0xc] sm:$0xf] %vm701, %v640
      %706 = vst.msk [vmem:[%s218 + $0x10] sm:$0xf] %vm701, %v641
      %707 = vst.msk [vmem:[%s218 + $0x14] sm:$0xf] %vm701, %v642
      %708 = vst.msk [vmem:[%s218 + $0x18] sm:$0xf] %vm701, %v643
      %709 = vst.msk [vmem:[%s218 + $0x1c] sm:$0xf] %vm701, %v644
      %710 = vst.msk [vmem:[%s218 + $0x20] sm:$0xf] %vm701, %v645
      %711 = vst.msk [vmem:[%s218 + $0x24] sm:$0xf] %vm701, %v646
      %712 = vst.msk [vmem:[%s218 + $0x28] sm:$0xf] %vm701, %v647
      %713 = vst.msk [vmem:[%s218 + $0x2c] sm:$0xf] %vm701, %v648
      %714 = vst.msk [vmem:[%s218 + $0x30] sm:$0xf] %vm701, %v649
      %715 = vst.msk [vmem:[%s218 + $0x34] sm:$0xf] %vm701, %v650
      %716 = vst.msk [vmem:[%s218 + $0x38] sm:$0xf] %vm701, %v651
      %717 = vst.msk [vmem:[%s218 + $0x3c] sm:$0xf] %vm701, %v652
      %718 = vst.msk [vmem:[%s218 + $0x40] sm:$0xf] %vm701, %v653
      %719 = vst.msk [vmem:[%s218 + $0x44] sm:$0xf] %vm701, %v654
      %720 = vst.msk [vmem:[%s218 + $0x48] sm:$0xf] %vm701, %v655
      %721 = vst.msk [vmem:[%s218 + $0x4c] sm:$0xf] %vm701, %v656
      %722 = vst.msk [vmem:[%s218 + $0x50] sm:$0xf] %vm701, %v657
      %723 = vst.msk [vmem:[%s218 + $0x54] sm:$0xf] %vm701, %v658
      %724 = vst.msk [vmem:[%s218 + $0x58] sm:$0xf] %vm701, %v659
      %725 = vst.msk [vmem:[%s218 + $0x5c] sm:$0xf] %vm701, %v660
      %726 = vst.msk [vmem:[%s218 + $0x60] sm:$0xf] %vm701, %v661
      %727 = vst.msk [vmem:[%s218 + $0x64] sm:$0xf] %vm701, %v662
      %728 = vst.msk [vmem:[%s218 + $0x68] sm:$0xf] %vm701, %v663
      %729 = vst.msk [vmem:[%s218 + $0x6c] sm:$0xf] %vm701, %v664
      %730 = vst.msk [vmem:[%s218 + $0x70] sm:$0xf] %vm701, %v665
      %731 = vst.msk [vmem:[%s218 + $0x74] sm:$0xf] %vm701, %v666
      %732 = vst.msk [vmem:[%s218 + $0x78] sm:$0xf] %vm701, %v667
      %733 = vst.msk [vmem:[%s218 + $0x7c] sm:$0xf] %vm701, %v668
      %vm734 = vcmask 64512
      %v735 = vsel %vm734, %v447, 0.0
      %v736 = vsel %vm734, %v450, 0.0
      %v737 = vadd.f32 %v735, %v736
      %v738 = vsel %vm734, %v455, 0.0
      %v739 = vadd.f32 %v737, %v738
      %v740 = vsel %vm734, %v458, 0.0
      %v741 = vadd.f32 %v739, %v740
      %v742 = vsel %vm734, %v463, 0.0
      %v743 = vadd.f32 %v741, %v742
      %v744 = vsel %vm734, %v466, 0.0
      %v745 = vadd.f32 %v743, %v744
      %v746 = vsel %vm734, %v471, 0.0
      %v747 = vadd.f32 %v745, %v746
      %v748 = vsel %vm734, %v474, 0.0
      %v749 = vadd.f32 %v747, %v748
      %v750 = vsel %vm734, %v479, 0.0
      %v751 = vadd.f32 %v749, %v750
      %v752 = vsel %vm734, %v482, 0.0
      %v753 = vadd.f32 %v751, %v752
      %v754 = vsel %vm734, %v487, 0.0
      %v755 = vadd.f32 %v753, %v754
      %v756 = vsel %vm734, %v490, 0.0
      %v757 = vadd.f32 %v755, %v756
      %v758 = vsel %vm734, %v495, 0.0
      %v759 = vadd.f32 %v757, %v758
      %v760 = vsel %vm734, %v498, 0.0
      %v761 = vadd.f32 %v759, %v760
      %v762 = vsel %vm734, %v503, 0.0
      %v763 = vadd.f32 %v761, %v762
      %v764 = vsel %vm734, %v506, 0.0
      %v765 = vadd.f32 %v763, %v764
      %v766 = vsel %vm734, %v511, 0.0
      %v767 = vadd.f32 %v765, %v766
      %v768 = vsel %vm734, %v514, 0.0
      %v769 = vadd.f32 %v767, %v768
      %v770 = vsel %vm734, %v519, 0.0
      %v771 = vadd.f32 %v769, %v770
      %v772 = vsel %vm734, %v522, 0.0
      %v773 = vadd.f32 %v771, %v772
      %v774 = vsel %vm734, %v527, 0.0
      %v775 = vadd.f32 %v773, %v774
      %v776 = vsel %vm734, %v530, 0.0
      %v777 = vadd.f32 %v775, %v776
      %v778 = vsel %vm734, %v535, 0.0
      %v779 = vadd.f32 %v777, %v778
      %v780 = vsel %vm734, %v538, 0.0
      %v781 = vadd.f32 %v779, %v780
      %v782 = vsel %vm734, %v543, 0.0
      %v783 = vadd.f32 %v781, %v782
      %v784 = vsel %vm734, %v546, 0.0
      %v785 = vadd.f32 %v783, %v784
      %v786 = vsel %vm734, %v551, 0.0
      %v787 = vadd.f32 %v785, %v786
      %v788 = vsel %vm734, %v554, 0.0
      %v789 = vadd.f32 %v787, %v788
      %v790 = vsel %vm734, %v559, 0.0
      %v791 = vadd.f32 %v789, %v790
      %v792 = vsel %vm734, %v562, 0.0
      %v793 = vadd.f32 %v791, %v792
      %v794 = vsel %vm734, %v567, 0.0
      %v795 = vadd.f32 %v793, %v794
      %v796 = vsel %vm734, %v570, 0.0
      %v797 = vadd.f32 %v795, %v796
      %v798 = vrot.slane %v797, 4
      %v799 = vadd.f32 %v797, %v798
      %v800 = vrot.slane %v799, 2
      %v801 = vadd.f32 %v799, %v800
      %v802 = vrot.slane %v801, 1
      %v803 = vadd.f32 %v801, %v802
      %vm804 = vcmask 57344
      %805 = vst.msk [vmem:[%s224] sm:$0x1] %vm804, %v803
      %v806 = vmul.f32 %v447, %v447
      %v807 = vmul.f32 %v450, %v450
      %v808 = vmul.f32 %v455, %v455
      %v809 = vmul.f32 %v458, %v458
      %v810 = vmul.f32 %v463, %v463
      %v811 = vmul.f32 %v466, %v466
      %v812 = vmul.f32 %v471, %v471
      %v813 = vmul.f32 %v474, %v474
      %v814 = vmul.f32 %v479, %v479
      %v815 = vmul.f32 %v482, %v482
      %v816 = vmul.f32 %v487, %v487
      %v817 = vmul.f32 %v490, %v490
      %v818 = vmul.f32 %v495, %v495
      %v819 = vmul.f32 %v498, %v498
      %v820 = vmul.f32 %v503, %v503
      %v821 = vmul.f32 %v506, %v506
      %v822 = vmul.f32 %v511, %v511
      %v823 = vmul.f32 %v514, %v514
      %v824 = vmul.f32 %v519, %v519
      %v825 = vmul.f32 %v522, %v522
      %v826 = vmul.f32 %v527, %v527
      %v827 = vmul.f32 %v530, %v530
      %v828 = vmul.f32 %v535, %v535
      %v829 = vmul.f32 %v538, %v538
      %v830 = vmul.f32 %v543, %v543
      %v831 = vmul.f32 %v546, %v546
      %v832 = vmul.f32 %v551, %v551
      %v833 = vmul.f32 %v554, %v554
      %v834 = vmul.f32 %v559, %v559
      %v835 = vmul.f32 %v562, %v562
      %v836 = vmul.f32 %v567, %v567
      %v837 = vmul.f32 %v570, %v570
      %v838 = vsel %vm734, %v806, 0.0
      %v839 = vsel %vm734, %v807, 0.0
      %v840 = vadd.f32 %v838, %v839
      %v841 = vsel %vm734, %v808, 0.0
      %v842 = vadd.f32 %v840, %v841
      %v843 = vsel %vm734, %v809, 0.0
      %v844 = vadd.f32 %v842, %v843
      %v845 = vsel %vm734, %v810, 0.0
      %v846 = vadd.f32 %v844, %v845
      %v847 = vsel %vm734, %v811, 0.0
      %v848 = vadd.f32 %v846, %v847
      %v849 = vsel %vm734, %v812, 0.0
      %v850 = vadd.f32 %v848, %v849
      %v851 = vsel %vm734, %v813, 0.0
      %v852 = vadd.f32 %v850, %v851
      %v853 = vsel %vm734, %v814, 0.0
      %v854 = vadd.f32 %v852, %v853
      %v855 = vsel %vm734, %v815, 0.0
      %v856 = vadd.f32 %v854, %v855
      %v857 = vsel %vm734, %v816, 0.0
      %v858 = vadd.f32 %v856, %v857
      %v859 = vsel %vm734, %v817, 0.0
      %v860 = vadd.f32 %v858, %v859
      %v861 = vsel %vm734, %v818, 0.0
      %v862 = vadd.f32 %v860, %v861
      %v863 = vsel %vm734, %v819, 0.0
      %v864 = vadd.f32 %v862, %v863
      %v865 = vsel %vm734, %v820, 0.0
      %v866 = vadd.f32 %v864, %v865
      %v867 = vsel %vm734, %v821, 0.0
      %v868 = vadd.f32 %v866, %v867
      %v869 = vsel %vm734, %v822, 0.0
      %v870 = vadd.f32 %v868, %v869
      %v871 = vsel %vm734, %v823, 0.0
      %v872 = vadd.f32 %v870, %v871
      %v873 = vsel %vm734, %v824, 0.0
      %v874 = vadd.f32 %v872, %v873
      %v875 = vsel %vm734, %v825, 0.0
      %v876 = vadd.f32 %v874, %v875
      %v877 = vsel %vm734, %v826, 0.0
      %v878 = vadd.f32 %v876, %v877
      %v879 = vsel %vm734, %v827, 0.0
      %v880 = vadd.f32 %v878, %v879
      %v881 = vsel %vm734, %v828, 0.0
      %v882 = vadd.f32 %v880, %v881
      %v883 = vsel %vm734, %v829, 0.0
      %v884 = vadd.f32 %v882, %v883
      %v885 = vsel %vm734, %v830, 0.0
      %v886 = vadd.f32 %v884, %v885
      %v887 = vsel %vm734, %v831, 0.0
      %v888 = vadd.f32 %v886, %v887
      %v889 = vsel %vm734, %v832, 0.0
      %v890 = vadd.f32 %v888, %v889
      %v891 = vsel %vm734, %v833, 0.0
      %v892 = vadd.f32 %v890, %v891
      %v893 = vsel %vm734, %v834, 0.0
      %v894 = vadd.f32 %v892, %v893
      %v895 = vsel %vm734, %v835, 0.0
      %v896 = vadd.f32 %v894, %v895
      %v897 = vsel %vm734, %v836, 0.0
      %v898 = vadd.f32 %v896, %v897
      %v899 = vsel %vm734, %v837, 0.0
      %v900 = vadd.f32 %v898, %v899
      %v901 = vrot.slane %v900, 4
      %v902 = vadd.f32 %v900, %v901
      %v903 = vrot.slane %v902, 2
      %v904 = vadd.f32 %v902, %v903
      %v905 = vrot.slane %v904, 1
      %v906 = vadd.f32 %v904, %v905
      %907 = vst.msk [vmem:[%s224 + $0x1] sm:$0x1] %vm804, %v906
      %s908 = smul.u32 32, %s20
      %p909 = scmp.lt.s32.totalorder %s19, 1
      %s910 = scalar_select %p909, %s19, 1
      %p911 = scmp.lt.s32.totalorder %s908, 31
      %s912 = scalar_select %p911, %s908, 31
      %s913 = smul.addr %s910, 32
      %s914 = sadd.s32 %s912, %s913
      %s915 = smul.addr %s914, 4
      %s916 = scalar_lea.vmem %s2, %s915
      %s917 = sadd.s32 %s19, %s20
      %p918 = scmp.lt.s32.totalorder %s917, 1
      %s919 = scalar_select %p918, %s917, 1
      %s920 = smul.addr %s919, 2
      %s921 = scalar_lea.vmem %s3, %s920
      // Predicated region
      $region29: #{basic_conv2d.2} parent=27 // pred_check
        %p922 = pneg %p96
      $region30: #{basic_conv2d.2} parent=27 // pred_check_branch
        %924 = sbr.rel (%p922) target = $region32
      $region31: #{basic_conv2d.2} parent=27 // pred_region
        %s925 = smul.u32 32, %s20
      $region32: #{basic_conv2d.2} parent=27 // pred_fallthru
        _
      // Predicated region
      $region33: #{basic_conv2d.2} parent=27 // pred_check
        %p926 = pneg %p124
      $region34: #{basic_conv2d.2} parent=27 // pred_check_branch
        %928 = sbr.rel (%p926) target = $region36
      $region35: #{basic_conv2d.2} parent=27 // pred_region
        %s929 = sadd.s32 %s19, %s20
      $region36: #{basic_conv2d.2} parent=27 // pred_fallthru
        _
    $region28: #{basic_conv2d.2} parent=5 // pred_fallthru
      _
    %p930 = scmp.le.s32.totalorder 2, %s10
    // Predicated region
    $region37: #{basic_conv2d.2} parent=5 // pred_check
      %p931 = pneg %p930
    $region38: #{basic_conv2d.2} parent=5 // pred_check_branch
      %933 = sbr.rel (%p931) target = $region40
    $region39: #{basic_conv2d.2} parent=5 // pred_region
      %s934 = ssub.s32 %s10, 2
      // Predicated region
      $region41: #{basic_conv2d.2} parent=39 // pred_check
        %p935 = pneg %p102
      $region42: #{basic_conv2d.2} parent=39 // pred_check_branch
        %937 = sbr.rel (%p935) target = $region44
      $region43: #{basic_conv2d.2} parent=39 // pred_region
        %s938 = smul.u32 32, %s22
        %p939 = scmp.lt.s32.totalorder %s21, 1
        %s940 = scalar_select %p939, %s21, 1
        %p941 = scmp.lt.s32.totalorder %s938, 31
        %s942 = scalar_select %p941, %s938, 31
        %s943 = smul.addr %s940, 32
        %s944 = sadd.s32 %s942, %s943
        %s945 = smul.addr %s944, 4
        %s946 = scalar_lea.vmem %s2, %s945
      $region44: #{basic_conv2d.2} parent=39 // pred_fallthru
        _
      // Predicated region
      $region45: #{basic_conv2d.2} parent=39 // pred_check
        %p947 = pneg %p130
      $region46: #{basic_conv2d.2} parent=39 // pred_check_branch
        %949 = sbr.rel (%p947) target = $region48
      $region47: #{basic_conv2d.2} parent=39 // pred_region
        %s950 = sadd.s32 %s21, %s22
        %p951 = scmp.lt.s32.totalorder %s950, 1
        %s952 = scalar_select %p951, %s950, 1
        %s953 = smul.addr %s952, 2
        %s954 = scalar_lea.vmem %s3, %s953
      $region48: #{basic_conv2d.2} parent=39 // pred_fallthru
        _
    $region40: #{basic_conv2d.2} parent=5 // pred_fallthru
      _
  $region6: #{basic_conv2d.2} parent=0 // loop_footer
    %s14 = sadd.s32 1, %s10
  $region7: #{basic_conv2d.2} parent=0 // loop_footer_branch
    %9 = sbr.rel target = $region3
  $region8: #{basic_conv2d.2} parent=0 // loop_exit
    _

</llo_original>
